<compile_context>
chip_gen: v5e
topology: v5e:2x2
jax: 0.10.0
libtpu: 0.0.40
codegen_flags: <defaults>
</compile_context>

<pallas_src>
import jax
import jax.numpy as jnp
from jax.experimental import pallas as pl
from jax.experimental.pallas import tpu as pltpu

# ----------------------------- model dims -----------------------------------
IN_CHANS = 1
STEM_CH = 32            # efficientnet_lite0 stem width
HEAD_IN_DIM = 1280      # efficientnet_lite0 classifier in_features
OUT_CLASSES = 5
NUM_LINK_CLASSES = 3    # LogisticCumulativeLink(3) -> 2 cutpoints, 3 probs
BN_EPS = 1e-3
LN_EPS = 1e-5
K_RAW = IN_CHANS * 27   # im2col contraction depth for the 3x3x3 stem conv
K_PAD = 32              # zero-padded to a sublane/MXU-friendly size
C_CHUNK = 256           # head channels per in-kernel chunk (caps live f32 tile)
N_CHUNKS = HEAD_IN_DIM // C_CHUNK


# --------------------------- fused Pallas kernel ------------------------------
def fused_kernel(patch_ref, w1_ref, b1_ref, w2_ref, b2_ref,
                 g_ref, beta_ref, wh_ref, bh_ref, cut_ref, out_ref, acc_ref):
    """Grid = (batch, P-tiles).  Per P-tile: stem conv (BN1 scale folded) + bias
    + ReLU6, chunked conv_head (BN2 scale folded) with a running global max pool.
    At the last P-tile: deferred BN2 bias + ReLU6, LayerNorm, 5 fused
    Linear(1280,1) heads, LogisticCumulativeLink(3); store (1, 15)."""
    p_idx = pl.program_id(1)

    @pl.when(p_idx == 0)
    def _():
        acc_ref[...] = jnp.full(acc_ref.shape, -jnp.inf, acc_ref.dtype)

    patch = patch_ref[0]                                   # (K_PAD, TP) bf16, lanes = TP
    # stem Conv3d(k=3,s=2,p=1) as matmul (contract over K), f32 accumulation.
    h = jax.lax.dot_general(
        patch, w1_ref[...],
        dimension_numbers=(((0,), (0,)), ((), ())),
        preferred_element_type=jnp.float32)                # (TP, 32)
    h = jnp.clip(h + b1_ref[...], 0.0, 6.0).astype(jnp.bfloat16)   # BN1 bias + ReLU6

    # conv_head 1x1x1 (BN2 scale folded into w2) + running global max pool,
    # chunked over the 1280 output channels.  BN2 bias + ReLU6 are deferred past
    # the max (monotone per channel => exactly commutes with the max pool).
    for c in range(N_CHUNKS):
        lo, hi = c * C_CHUNK, (c + 1) * C_CHUNK
        fc = jnp.dot(h, w2_ref[:, lo:hi],
                     preferred_element_type=jnp.float32)   # (TP, C_CHUNK)
        acc_ref[:, lo:hi] = jnp.maximum(acc_ref[:, lo:hi],
                                        jnp.max(fc, axis=0, keepdims=True))

    @pl.when(p_idx == pl.num_programs(1) - 1)
    def _():
        # deferred BN2 bias + ReLU6 applied once to the (1, 1280) pooled row
        x = jnp.clip(acc_ref[...] + b2_ref[...], 0.0, 6.0)
        mu = jnp.mean(x, axis=-1, keepdims=True)
        var = jnp.mean((x - mu) ** 2, axis=-1, keepdims=True)       # biased (torch LN)
        ln = (x - mu) * jax.lax.rsqrt(var + LN_EPS) * g_ref[...] + beta_ref[...]
        # all 5 heads' Linear(1280,1) fused into one (1280, 5) matmul
        scores = jnp.dot(ln, wh_ref[...],
                         preferred_element_type=jnp.float32) + bh_ref[...]   # (1, 5)
        cut = cut_ref[...]                                           # (2, 5)
        s0 = jax.nn.sigmoid(cut[0:1, :] - scores)
        s1 = jax.nn.sigmoid(cut[1:2, :] - scores)
        # LogisticCumulativeLink probs [s0, s1-s0, 1-s1], class-major -> (1, 15)
        out_ref[0] = jnp.concatenate([s0, s1 - s0, 1.0 - s1], axis=-1)


# ------------------------------ wrappers --------------------------------------
def extract_stem_patches(x):
    """im2col for the stem Conv3d(k=3, s=2, p=1). x: (N, C, D, H, W) float32.
    Returns (N, K_RAW, P) with K = C*27, P = D'*H'*W'  (no HBM transpose)."""
    patches = jax.lax.conv_general_dilated_patches(
        x, filter_shape=(3, 3, 3), window_strides=(2, 2, 2),
        padding=[(1, 1), (1, 1), (1, 1)])                  # (N, C*27, D', H', W')
    n, k = patches.shape[0], patches.shape[1]
    return patches.reshape(n, k, -1)                       # (N, K, P)


def _round_up(x, m):
    return (x + m - 1) // m * m


def cnn_model_3d_multihead_forward(x, params, *, p_tile=4096,
                                   vmem_limit_bytes=32 << 20):
    x = x.astype(jnp.float32)
    patches = extract_stem_patches(x)                       # (N, K_RAW, P) f32
    N, K, P = patches.shape
    assert K == K_RAW

    # lane-aligned P tile; pad P up to a tile multiple with EDGE replication
    # (duplicated spatial positions cannot change a global max pool).
    if P <= p_tile:
        tp = _round_up(P, 128)
    else:
        tp = max(128, (p_tile // 128) * 128)
    P_pad = _round_up(P, tp)

    patches = jnp.pad(patches, ((0, 0), (0, K_PAD - K), (0, 0)))        # K: zeros
    if P_pad > P:
        patches = jnp.pad(patches, ((0, 0), (0, 0), (0, P_pad - P)), mode="edge")
    patches = patches.astype(jnp.bfloat16)                   # (N, K_PAD, P_pad)

    # fold BN scales into the matmul weights on the host
    w1 = jnp.zeros((K_PAD, STEM_CH), jnp.float32)
    w1 = w1.at[:K, :].set(params["w_stem"] * params["bn1_scale"])
    w1 = w1.astype(jnp.bfloat16)
    w2 = (params["w_head"] * params["bn2_scale"]).astype(jnp.bfloat16)

    grid = (N, P_pad // tp)
    const2 = lambda n, p: (0, 0)

    out_flat = pl.pallas_call(
        fused_kernel,
        out_shape=jax.ShapeDtypeStruct(
            (N, 1, NUM_LINK_CLASSES * OUT_CLASSES), jnp.float32),
        grid=grid,
        in_specs=[
            pl.BlockSpec((1, K_PAD, tp), lambda n, p: (n, 0, p)),   # lane-dense patches
            pl.BlockSpec((K_PAD, STEM_CH), const2),                 # w_stem (BN1-folded)
            pl.BlockSpec((1, STEM_CH), const2),                     # bn1 bias
            pl.BlockSpec((STEM_CH, HEAD_IN_DIM), const2),           # w_head (BN2-folded)
            pl.BlockSpec((1, HEAD_IN_DIM), const2),                 # bn2 bias (deferred)
            pl.BlockSpec((1, HEAD_IN_DIM), const2),                 # ln gamma
            pl.BlockSpec((1, HEAD_IN_DIM), const2),                 # ln beta
            pl.BlockSpec((HEAD_IN_DIM, OUT_CLASSES), const2),       # fused head weights
            pl.BlockSpec((1, OUT_CLASSES), const2),                 # head biases
            pl.BlockSpec((2, OUT_CLASSES), const2),                 # cutpoints
        ],
        out_specs=pl.BlockSpec((1, 1, NUM_LINK_CLASSES * OUT_CLASSES),
                               lambda n, p: (n, 0, 0)),
        scratch_shapes=[pltpu.VMEM((1, HEAD_IN_DIM), jnp.float32)],
        compiler_params=pltpu.CompilerParams(
            dimension_semantics=("parallel", "arbitrary"),
            vmem_limit_bytes=vmem_limit_bytes),
    )(patches, w1, params["bn1_bias"], w2, params["bn2_bias"],
      params["ln_gamma"], params["ln_beta"],
      params["w_heads"], params["b_heads"], params["cutpoints"])

    # class-major (N,1,3*5) -> (N,3,5) -> (N, out_classes, 3),
    # matching torch.swapaxes(torch.stack([...]), 0, 1).
    return jnp.transpose(
        out_flat.reshape(N, NUM_LINK_CLASSES, OUT_CLASSES), (0, 2, 1))


# --------------------------- pure-JAX f32 reference ----------------------------
def reference_forward(x, params):
    patches = extract_stem_patches(x.astype(jnp.float32))           # (N, K, P)
    h = jnp.einsum("nkp,kc->npc", patches, params["w_stem"])
    h = jnp.clip(h * params["bn1_scale"] + params["bn1_bias"], 0.0, 6.0)
    f = jnp.einsum("npc,cd->npd", h, params["w_head"])
    f = jnp.clip(f * params["bn2_scale"] + params["bn2_bias"], 0.0, 6.0)
    pooled = jnp.max(f, axis=1)                                     # (N, 1280)
    mu = jnp.mean(pooled, axis=-1, keepdims=True)
    var = jnp.mean((pooled - mu) ** 2, axis=-1, keepdims=True)
    ln = (pooled - mu) * jax.lax.rsqrt(var + LN_EPS) * params["ln_gamma"] \
        + params["ln_beta"]
    scores = ln @ params["w_heads"] + params["b_heads"]             # (N, 5)
    c = params["cutpoints"]
    s0 = jax.nn.sigmoid(c[0:1, :] - scores)
    s1 = jax.nn.sigmoid(c[1:2, :] - scores)
    return jnp.stack([s0, s1 - s0, 1.0 - s1], axis=-1)              # (N, 5, 3)


# --------------------------- deterministic params -----------------------------
def init_params(key):
    k1, k2, k3, k4 = jax.random.split(key, 4)
    # BatchNorm folded (inference): scale = gamma/sqrt(var+eps), bias = beta - mean*scale
    bn1_scale = jnp.ones((1, STEM_CH), jnp.float32) / jnp.sqrt(1.0 + BN_EPS)
    bn1_bias = jnp.zeros((1, STEM_CH), jnp.float32)
    bn2_scale = jnp.ones((1, HEAD_IN_DIM), jnp.float32) / jnp.sqrt(1.0 + BN_EPS)
    bn2_bias = jnp.zeros((1, HEAD_IN_DIM), jnp.float32)
    # LogisticCumulativeLink 'ordered' init: arange(2) - 2/2 = [-1, 0] per head
    cutpoints = jnp.stack(
        [jnp.full((OUT_CLASSES,), -1.0, jnp.float32),
         jnp.full((OUT_CLASSES,), 0.0, jnp.float32)], axis=0)        # (2, 5)
    return {
        "w_stem": 0.1 * jax.random.normal(k1, (K_RAW, STEM_CH), jnp.float32),
        "bn1_scale": bn1_scale, "bn1_bias": bn1_bias,
        "w_head": 0.05 * jax.random.normal(k2, (STEM_CH, HEAD_IN_DIM), jnp.float32),
        "bn2_scale": bn2_scale, "bn2_bias": bn2_bias,
        "ln_gamma": jnp.ones((1, HEAD_IN_DIM), jnp.float32),
        "ln_beta": jnp.zeros((1, HEAD_IN_DIM), jnp.float32),
        "w_heads": 0.02 * jax.random.normal(k3, (HEAD_IN_DIM, OUT_CLASSES), jnp.float32),
        "b_heads": 0.01 * jax.random.normal(k4, (1, OUT_CLASSES), jnp.float32),
        "cutpoints": cutpoints,
    }


# --------------------------------- main ---------------------------------------
if __name__ == "__main__":
    key = jax.random.PRNGKey(0)
    kx, kp = jax.random.split(key)
    # small, module-consistent shapes: batch=2, in_chans=1, (16,16,14) volume (NCDHW)
    # -> P = 8*8*7 = 448 spatial positions after the stride-2 stem.
    x = jax.random.normal(kx, (2, IN_CHANS, 16, 16, 14), jnp.float32)
    params = init_params(kp)

    # p_tile=256 at this toy size exercises both the multi-step running-max
    # accumulator (448 -> padded 512 = 2 tiles) and the edge-replicated P tail;
    # use the default 4096 (with the chunked epilogue) for real volumes.
    out = cnn_model_3d_multihead_forward(x, params, p_tile=256)
    out = jax.block_until_ready(out)

    assert out.shape == (2, OUT_CLASSES, NUM_LINK_CLASSES), out.shape
    # cumulative-link probabilities per head must sum to 1
    assert bool(jnp.allclose(out.sum(axis=-1), 1.0, atol=1e-5))
    # bf16-matmul kernel vs f32 pure-JAX reference
    ref = reference_forward(x, params)
    assert bool(jnp.allclose(out, ref, atol=5e-2)), \
        float(jnp.max(jnp.abs(out - ref)))
    print("KERNEL_OK")
</pallas_src>

<mosaic_0001>
module attributes {stable_mosaic.version = 11 : i64} {
  func.func @fused_kernel(%arg0: i32, %arg1: i32, %arg2: memref<1x32x256xbf16, #tpu.memory_space<vmem>>, %arg3: memref<32x32xbf16, #tpu.memory_space<vmem>>, %arg4: memref<1x32xf32, #tpu.memory_space<vmem>>, %arg5: memref<32x1280xbf16, #tpu.memory_space<vmem>>, %arg6: memref<1x1280xf32, #tpu.memory_space<vmem>>, %arg7: memref<1x1280xf32, #tpu.memory_space<vmem>>, %arg8: memref<1x1280xf32, #tpu.memory_space<vmem>>, %arg9: memref<1280x5xf32, #tpu.memory_space<vmem>>, %arg10: memref<1x5xf32, #tpu.memory_space<vmem>>, %arg11: memref<2x5xf32, #tpu.memory_space<vmem>>, %arg12: memref<1x1x15xf32, #tpu.memory_space<vmem>>, %arg13: memref<1x1280xf32, #tpu.memory_space<vmem>>) attributes {dimension_semantics = [#tpu.dimension_semantics<parallel>, #tpu.dimension_semantics<arbitrary>], iteration_bounds = array<i64: 2, 2>, scalar_prefetch = 0 : i64, scratch_operands = 1 : i64, tpu.core_type = #tpu.core_type<tc>, window_params = [{transform_indices = @transform_0, window_bounds = array<i64: 1, 32, 256>}, {pipeline_mode = #tpu.pipeline_mode<synchronous>, transform_indices = @transform_1, window_bounds = array<i64: 32, 32>}, {pipeline_mode = #tpu.pipeline_mode<synchronous>, transform_indices = @transform_2, window_bounds = array<i64: 1, 32>}, {pipeline_mode = #tpu.pipeline_mode<synchronous>, transform_indices = @transform_3, window_bounds = array<i64: 32, 1280>}, {pipeline_mode = #tpu.pipeline_mode<synchronous>, transform_indices = @transform_4, window_bounds = array<i64: 1, 1280>}, {pipeline_mode = #tpu.pipeline_mode<synchronous>, transform_indices = @transform_5, window_bounds = array<i64: 1, 1280>}, {pipeline_mode = #tpu.pipeline_mode<synchronous>, transform_indices = @transform_6, window_bounds = array<i64: 1, 1280>}, {pipeline_mode = #tpu.pipeline_mode<synchronous>, transform_indices = @transform_7, window_bounds = array<i64: 1280, 5>}, {pipeline_mode = #tpu.pipeline_mode<synchronous>, transform_indices = @transform_8, window_bounds = array<i64: 1, 5>}, {pipeline_mode = #tpu.pipeline_mode<synchronous>, transform_indices = @transform_9, window_bounds = array<i64: 2, 5>}, {transform_indices = @transform_10, window_bounds = array<i64: 1, 1, 15>}]} {
    %c0_i32 = arith.constant 0 : i32
    %0 = arith.cmpi eq, %arg1, %c0_i32 : i32
    %1 = arith.extui %0 : i1 to i32
    %c0_i32_0 = arith.constant 0 : i32
    %2 = arith.cmpi ne, %1, %c0_i32_0 : i32
    scf.if %2 {
      %cst_46 = arith.constant 0xFF800000 : f32
      %53 = vector.broadcast %cst_46 : f32 to vector<1x1280xf32>
      %c0_47 = arith.constant 0 : index
      %c0_48 = arith.constant 0 : index
      %54 = vector.load %arg13[%c0_47, %c0_48] : memref<1x1280xf32, #tpu.memory_space<vmem>>, vector<1x1280xf32>
      tpu.vector_store %arg13[%c0_47, %c0_48], %53 {strides = array<i32>} : memref<1x1280xf32, #tpu.memory_space<vmem>>, vector<1x1280xf32>,
    } else {
    }
    %c0 = arith.constant 0 : index
    %c0_1 = arith.constant 0 : index
    %c0_2 = arith.constant 0 : index
    %3 = vector.load %arg2[%c0, %c0_1, %c0_2] : memref<1x32x256xbf16, #tpu.memory_space<vmem>>, vector<1x32x256xbf16>
    %4 = vector.shape_cast %3 : vector<1x32x256xbf16> to vector<32x256xbf16>
    %c0_3 = arith.constant 0 : index
    %c0_4 = arith.constant 0 : index
    %5 = vector.load %arg3[%c0_3, %c0_4] : memref<32x32xbf16, #tpu.memory_space<vmem>>, vector<32x32xbf16>
    %cst = arith.constant dense<0.000000e+00> : vector<256x32xf32>
    %6 = tpu.matmul %4, %5, %cst {dimension_numbers = #tpu.dot_dimension_numbers<[0], [0], [1], [1], [0, 1, 1, 1], [], []>} : vector<32x256xbf16>, vector<32x32xbf16>, vector<256x32xf32> -> vector<256x32xf32>
    %c0_5 = arith.constant 0 : index
    %c0_6 = arith.constant 0 : index
    %7 = vector.load %arg4[%c0_5, %c0_6] : memref<1x32xf32, #tpu.memory_space<vmem>>, vector<1x32xf32>
    %8 = vector.broadcast %7 : vector<1x32xf32> to vector<256x32xf32>
    %9 = arith.addf %6, %8 : vector<256x32xf32>
    %cst_7 = arith.constant 0.000000e+00 : f32
    %cst_8 = arith.constant 6.000000e+00 : f32
    %10 = vector.broadcast %cst_7 : f32 to vector<256x32xf32>
    %11 = arith.maximumf %10, %9 : vector<256x32xf32>
    %12 = vector.broadcast %cst_8 : f32 to vector<256x32xf32>
    %13 = arith.minimumf %12, %11 : vector<256x32xf32>
    %14 = arith.truncf %13 : vector<256x32xf32> to vector<256x32xbf16>
    %c0_9 = arith.constant 0 : index
    %c0_10 = arith.constant 0 : index
    %15 = vector.load %arg5[%c0_9, %c0_10] : memref<32x1280xbf16, #tpu.memory_space<vmem>>, vector<32x256xbf16>
    %cst_11 = arith.constant dense<0.000000e+00> : vector<256x256xf32>
    %16 = tpu.matmul %14, %15, %cst_11 {dimension_numbers = #tpu.dot_dimension_numbers<[1], [0], [0], [1], [0, 0, 1, 1], [], []>} : vector<256x32xbf16>, vector<32x256xbf16>, vector<256x256xf32> -> vector<256x256xf32>
    %c0_12 = arith.constant 0 : index
    %c0_13 = arith.constant 0 : index
    %17 = vector.load %arg13[%c0_12, %c0_13] : memref<1x1280xf32, #tpu.memory_space<vmem>>, vector<1x256xf32>
    %cst_14 = arith.constant dense<0xFF800000> : vector<256xf32>
    %18 = vector.multi_reduction <maximumf>, %16, %cst_14 [0] : vector<256x256xf32> to vector<256xf32>
    %19 = vector.shape_cast %18 : vector<256xf32> to vector<1x256xf32>
    %20 = arith.maximumf %17, %19 : vector<1x256xf32>
    %c0_15 = arith.constant 0 : index
    %c0_16 = arith.constant 0 : index
    %21 = vector.load %arg13[%c0_15, %c0_16] : memref<1x1280xf32, #tpu.memory_space<vmem>>, vector<1x256xf32>
    tpu.vector_store %arg13[%c0_15, %c0_16], %20 {strides = array<i32>} : memref<1x1280xf32, #tpu.memory_space<vmem>>, vector<1x256xf32>,
    %c0_17 = arith.constant 0 : index
    %c256 = arith.constant 256 : index
    %22 = vector.load %arg5[%c0_17, %c256] : memref<32x1280xbf16, #tpu.memory_space<vmem>>, vector<32x256xbf16>
    %cst_18 = arith.constant dense<0.000000e+00> : vector<256x256xf32>
    %23 = tpu.matmul %14, %22, %cst_18 {dimension_numbers = #tpu.dot_dimension_numbers<[1], [0], [0], [1], [0, 0, 1, 1], [], []>} : vector<256x32xbf16>, vector<32x256xbf16>, vector<256x256xf32> -> vector<256x256xf32>
    %c0_19 = arith.constant 0 : index
    %c256_20 = arith.constant 256 : index
    %24 = vector.load %arg13[%c0_19, %c256_20] : memref<1x1280xf32, #tpu.memory_space<vmem>>, vector<1x256xf32>
    %cst_21 = arith.constant dense<0xFF800000> : vector<256xf32>
    %25 = vector.multi_reduction <maximumf>, %23, %cst_21 [0] : vector<256x256xf32> to vector<256xf32>
    %26 = vector.shape_cast %25 : vector<256xf32> to vector<1x256xf32>
    %27 = arith.maximumf %24, %26 : vector<1x256xf32>
    %c0_22 = arith.constant 0 : index
    %c256_23 = arith.constant 256 : index
    %28 = vector.load %arg13[%c0_22, %c256_23] : memref<1x1280xf32, #tpu.memory_space<vmem>>, vector<1x256xf32>
    tpu.vector_store %arg13[%c0_22, %c256_23], %27 {strides = array<i32>} : memref<1x1280xf32, #tpu.memory_space<vmem>>, vector<1x256xf32>,
    %c0_24 = arith.constant 0 : index
    %c512 = arith.constant 512 : index
    %29 = vector.load %arg5[%c0_24, %c512] : memref<32x1280xbf16, #tpu.memory_space<vmem>>, vector<32x256xbf16>
    %cst_25 = arith.constant dense<0.000000e+00> : vector<256x256xf32>
    %30 = tpu.matmul %14, %29, %cst_25 {dimension_numbers = #tpu.dot_dimension_numbers<[1], [0], [0], [1], [0, 0, 1, 1], [], []>} : vector<256x32xbf16>, vector<32x256xbf16>, vector<256x256xf32> -> vector<256x256xf32>
    %c0_26 = arith.constant 0 : index
    %c512_27 = arith.constant 512 : index
    %31 = vector.load %arg13[%c0_26, %c512_27] : memref<1x1280xf32, #tpu.memory_space<vmem>>, vector<1x256xf32>
    %cst_28 = arith.constant dense<0xFF800000> : vector<256xf32>
    %32 = vector.multi_reduction <maximumf>, %30, %cst_28 [0] : vector<256x256xf32> to vector<256xf32>
    %33 = vector.shape_cast %32 : vector<256xf32> to vector<1x256xf32>
    %34 = arith.maximumf %31, %33 : vector<1x256xf32>
    %c0_29 = arith.constant 0 : index
    %c512_30 = arith.constant 512 : index
    %35 = vector.load %arg13[%c0_29, %c512_30] : memref<1x1280xf32, #tpu.memory_space<vmem>>, vector<1x256xf32>
    tpu.vector_store %arg13[%c0_29, %c512_30], %34 {strides = array<i32>} : memref<1x1280xf32, #tpu.memory_space<vmem>>, vector<1x256xf32>,
    %c0_31 = arith.constant 0 : index
    %c768 = arith.constant 768 : index
    %36 = vector.load %arg5[%c0_31, %c768] : memref<32x1280xbf16, #tpu.memory_space<vmem>>, vector<32x256xbf16>
    %cst_32 = arith.constant dense<0.000000e+00> : vector<256x256xf32>
    %37 = tpu.matmul %14, %36, %cst_32 {dimension_numbers = #tpu.dot_dimension_numbers<[1], [0], [0], [1], [0, 0, 1, 1], [], []>} : vector<256x32xbf16>, vector<32x256xbf16>, vector<256x256xf32> -> vector<256x256xf32>
    %c0_33 = arith.constant 0 : index
    %c768_34 = arith.constant 768 : index
    %38 = vector.load %arg13[%c0_33, %c768_34] : memref<1x1280xf32, #tpu.memory_space<vmem>>, vector<1x256xf32>
    %cst_35 = arith.constant dense<0xFF800000> : vector<256xf32>
    %39 = vector.multi_reduction <maximumf>, %37, %cst_35 [0] : vector<256x256xf32> to vector<256xf32>
    %40 = vector.shape_cast %39 : vector<256xf32> to vector<1x256xf32>
    %41 = arith.maximumf %38, %40 : vector<1x256xf32>
    %c0_36 = arith.constant 0 : index
    %c768_37 = arith.constant 768 : index
    %42 = vector.load %arg13[%c0_36, %c768_37] : memref<1x1280xf32, #tpu.memory_space<vmem>>, vector<1x256xf32>
    tpu.vector_store %arg13[%c0_36, %c768_37], %41 {strides = array<i32>} : memref<1x1280xf32, #tpu.memory_space<vmem>>, vector<1x256xf32>,
    %c0_38 = arith.constant 0 : index
    %c1024 = arith.constant 1024 : index
    %43 = vector.load %arg5[%c0_38, %c1024] : memref<32x1280xbf16, #tpu.memory_space<vmem>>, vector<32x256xbf16>
    %cst_39 = arith.constant dense<0.000000e+00> : vector<256x256xf32>
    %44 = tpu.matmul %14, %43, %cst_39 {dimension_numbers = #tpu.dot_dimension_numbers<[1], [0], [0], [1], [0, 0, 1, 1], [], []>} : vector<256x32xbf16>, vector<32x256xbf16>, vector<256x256xf32> -> vector<256x256xf32>
    %c0_40 = arith.constant 0 : index
    %c1024_41 = arith.constant 1024 : index
    %45 = vector.load %arg13[%c0_40, %c1024_41] : memref<1x1280xf32, #tpu.memory_space<vmem>>, vector<1x256xf32>
    %cst_42 = arith.constant dense<0xFF800000> : vector<256xf32>
    %46 = vector.multi_reduction <maximumf>, %44, %cst_42 [0] : vector<256x256xf32> to vector<256xf32>
    %47 = vector.shape_cast %46 : vector<256xf32> to vector<1x256xf32>
    %48 = arith.maximumf %45, %47 : vector<1x256xf32>
    %c0_43 = arith.constant 0 : index
    %c1024_44 = arith.constant 1024 : index
    %49 = vector.load %arg13[%c0_43, %c1024_44] : memref<1x1280xf32, #tpu.memory_space<vmem>>, vector<1x256xf32>
    tpu.vector_store %arg13[%c0_43, %c1024_44], %48 {strides = array<i32>} : memref<1x1280xf32, #tpu.memory_space<vmem>>, vector<1x256xf32>,
    %c1_i32 = arith.constant 1 : i32
    %50 = arith.cmpi eq, %arg1, %c1_i32 : i32
    %51 = arith.extui %50 : i1 to i32
    %c0_i32_45 = arith.constant 0 : i32
    %52 = arith.cmpi ne, %51, %c0_i32_45 : i32
    scf.if %52 {
      %c0_46 = arith.constant 0 : index
      %c0_47 = arith.constant 0 : index
      %53 = vector.load %arg13[%c0_46, %c0_47] : memref<1x1280xf32, #tpu.memory_space<vmem>>, vector<1x1280xf32>
      %c0_48 = arith.constant 0 : index
      %c0_49 = arith.constant 0 : index
      %54 = vector.load %arg6[%c0_48, %c0_49] : memref<1x1280xf32, #tpu.memory_space<vmem>>, vector<1x1280xf32>
      %55 = arith.addf %53, %54 : vector<1x1280xf32>
      %cst_50 = arith.constant 0.000000e+00 : f32
      %cst_51 = arith.constant 6.000000e+00 : f32
      %56 = vector.broadcast %cst_50 : f32 to vector<1x1280xf32>
      %57 = arith.maximumf %56, %55 : vector<1x1280xf32>
      %58 = vector.broadcast %cst_51 : f32 to vector<1x1280xf32>
      %59 = arith.minimumf %58, %57 : vector<1x1280xf32>
      %cst_52 = arith.constant dense<0.000000e+00> : vector<1xf32>
      %60 = vector.multi_reduction <add>, %59, %cst_52 [1] : vector<1x1280xf32> to vector<1xf32>
      %61 = vector.shape_cast %60 : vector<1xf32> to vector<1x1xf32>
      %cst_53 = arith.constant 1.280000e+03 : f32
      %62 = vector.broadcast %cst_53 : f32 to vector<1x1xf32>
      %63 = arith.divf %61, %62 : vector<1x1xf32>
      %64 = vector.broadcast %63 : vector<1x1xf32> to vector<1x1280xf32>
      %65 = arith.subf %59, %64 : vector<1x1280xf32>
      %66 = arith.mulf %65, %65 : vector<1x1280xf32>
      %cst_54 = arith.constant dense<0.000000e+00> : vector<1xf32>
      %67 = vector.multi_reduction <add>, %66, %cst_54 [1] : vector<1x1280xf32> to vector<1xf32>
      %68 = vector.shape_cast %67 : vector<1xf32> to vector<1x1xf32>
      %cst_55 = arith.constant 1.280000e+03 : f32
      %69 = vector.broadcast %cst_55 : f32 to vector<1x1xf32>
      %70 = arith.divf %68, %69 : vector<1x1xf32>
      %71 = vector.broadcast %63 : vector<1x1xf32> to vector<1x1280xf32>
      %72 = arith.subf %59, %71 : vector<1x1280xf32>
      %cst_56 = arith.constant 9.99999974E-6 : f32
      %73 = vector.broadcast %cst_56 : f32 to vector<1x1xf32>
      %74 = arith.addf %70, %73 : vector<1x1xf32>
      %75 = math.rsqrt %74 : vector<1x1xf32>
      %76 = vector.broadcast %75 : vector<1x1xf32> to vector<1x1280xf32>
      %77 = arith.mulf %72, %76 : vector<1x1280xf32>
      %c0_57 = arith.constant 0 : index
      %c0_58 = arith.constant 0 : index
      %78 = vector.load %arg7[%c0_57, %c0_58] : memref<1x1280xf32, #tpu.memory_space<vmem>>, vector<1x1280xf32>
      %79 = arith.mulf %77, %78 : vector<1x1280xf32>
      %c0_59 = arith.constant 0 : index
      %c0_60 = arith.constant 0 : index
      %80 = vector.load %arg8[%c0_59, %c0_60] : memref<1x1280xf32, #tpu.memory_space<vmem>>, vector<1x1280xf32>
      %81 = arith.addf %79, %80 : vector<1x1280xf32>
      %c0_61 = arith.constant 0 : index
      %c0_62 = arith.constant 0 : index
      %82 = vector.load %arg9[%c0_61, %c0_62] : memref<1280x5xf32, #tpu.memory_space<vmem>>, vector<1280x5xf32>
      %cst_63 = arith.constant dense<0.000000e+00> : vector<1x5xf32>
      %83 = tpu.matmul %81, %82, %cst_63 {dimension_numbers = #tpu.dot_dimension_numbers<[1], [0], [0], [1], [0, 0, 1, 1], [], []>} : vector<1x1280xf32>, vector<1280x5xf32>, vector<1x5xf32> -> vector<1x5xf32>
      %c0_64 = arith.constant 0 : index
      %c0_65 = arith.constant 0 : index
      %84 = vector.load %arg10[%c0_64, %c0_65] : memref<1x5xf32, #tpu.memory_space<vmem>>, vector<1x5xf32>
      %85 = arith.addf %83, %84 : vector<1x5xf32>
      %c0_66 = arith.constant 0 : index
      %c0_67 = arith.constant 0 : index
      %86 = vector.load %arg11[%c0_66, %c0_67] : memref<2x5xf32, #tpu.memory_space<vmem>>, vector<2x5xf32>
      %87 = vector.extract_strided_slice %86 {offsets = [0, 0], sizes = [1, 5], strides = [1, 1]} : vector<2x5xf32> to vector<1x5xf32>
      %88 = arith.subf %87, %85 : vector<1x5xf32>
      %89 = arith.negf %88 : vector<1x5xf32>
      %90 = math.exp %89 : vector<1x5xf32>
      %cst_68 = arith.constant 1.000000e+00 : f32
      %91 = vector.broadcast %cst_68 : f32 to vector<1x5xf32>
      %92 = arith.addf %91, %90 : vector<1x5xf32>
      %93 = arith.divf %91, %92 : vector<1x5xf32>
      %94 = vector.extract_strided_slice %86 {offsets = [1, 0], sizes = [1, 5], strides = [1, 1]} : vector<2x5xf32> to vector<1x5xf32>
      %95 = arith.subf %94, %85 : vector<1x5xf32>
      %96 = arith.negf %95 : vector<1x5xf32>
      %97 = math.exp %96 : vector<1x5xf32>
      %cst_69 = arith.constant 1.000000e+00 : f32
      %98 = vector.broadcast %cst_69 : f32 to vector<1x5xf32>
      %99 = arith.addf %98, %97 : vector<1x5xf32>
      %100 = arith.divf %98, %99 : vector<1x5xf32>
      %101 = arith.subf %100, %93 : vector<1x5xf32>
      %cst_70 = arith.constant 1.000000e+00 : f32
      %102 = vector.broadcast %cst_70 : f32 to vector<1x5xf32>
      %103 = arith.subf %102, %100 : vector<1x5xf32>
      %104 = tpu.concatenate %93, %101, %103 in 1 : vector<1x5xf32>, vector<1x5xf32>, vector<1x5xf32> -> vector<1x15xf32>
      %c0_71 = arith.constant 0 : index
      %c0_72 = arith.constant 0 : index
      %c0_73 = arith.constant 0 : index
      %105 = vector.load %arg12[%c0_71, %c0_72, %c0_73] : memref<1x1x15xf32, #tpu.memory_space<vmem>>, vector<1x1x15xf32>
      %106 = vector.shape_cast %105 : vector<1x1x15xf32> to vector<1x15xf32>
      %107 = vector.shape_cast %104 : vector<1x15xf32> to vector<1x1x15xf32>
      tpu.vector_store %arg12[%c0_71, %c0_72, %c0_73], %107 {strides = array<i32>} : memref<1x1x15xf32, #tpu.memory_space<vmem>>, vector<1x1x15xf32>,
    } else {
    }
    return
  }
  func.func @transform_0(%arg0: i32, %arg1: i32) -> (i32, i32, i32) {
    %c0_i32 = arith.constant 0 : i32
    %c0_i32_0 = arith.constant 0 : i32
    return %arg0, %c0_i32, %arg1 : i32, i32, i32
  }
  func.func @transform_1(%arg0: i32, %arg1: i32) -> (i32, i32) {
    %c0_i32 = arith.constant 0 : i32
    %c0_i32_0 = arith.constant 0 : i32
    %c0_i32_1 = arith.constant 0 : i32
    return %c0_i32, %c0_i32_0 : i32, i32
  }
  func.func @transform_2(%arg0: i32, %arg1: i32) -> (i32, i32) {
    %c0_i32 = arith.constant 0 : i32
    %c0_i32_0 = arith.constant 0 : i32
    %c0_i32_1 = arith.constant 0 : i32
    return %c0_i32, %c0_i32_0 : i32, i32
  }
  func.func @transform_3(%arg0: i32, %arg1: i32) -> (i32, i32) {
    %c0_i32 = arith.constant 0 : i32
    %c0_i32_0 = arith.constant 0 : i32
    %c0_i32_1 = arith.constant 0 : i32
    return %c0_i32, %c0_i32_0 : i32, i32
  }
  func.func @transform_4(%arg0: i32, %arg1: i32) -> (i32, i32) {
    %c0_i32 = arith.constant 0 : i32
    %c0_i32_0 = arith.constant 0 : i32
    %c0_i32_1 = arith.constant 0 : i32
    return %c0_i32, %c0_i32_0 : i32, i32
  }
  func.func @transform_5(%arg0: i32, %arg1: i32) -> (i32, i32) {
    %c0_i32 = arith.constant 0 : i32
    %c0_i32_0 = arith.constant 0 : i32
    %c0_i32_1 = arith.constant 0 : i32
    return %c0_i32, %c0_i32_0 : i32, i32
  }
  func.func @transform_6(%arg0: i32, %arg1: i32) -> (i32, i32) {
    %c0_i32 = arith.constant 0 : i32
    %c0_i32_0 = arith.constant 0 : i32
    %c0_i32_1 = arith.constant 0 : i32
    return %c0_i32, %c0_i32_0 : i32, i32
  }
  func.func @transform_7(%arg0: i32, %arg1: i32) -> (i32, i32) {
    %c0_i32 = arith.constant 0 : i32
    %c0_i32_0 = arith.constant 0 : i32
    %c0_i32_1 = arith.constant 0 : i32
    return %c0_i32, %c0_i32_0 : i32, i32
  }
  func.func @transform_8(%arg0: i32, %arg1: i32) -> (i32, i32) {
    %c0_i32 = arith.constant 0 : i32
    %c0_i32_0 = arith.constant 0 : i32
    %c0_i32_1 = arith.constant 0 : i32
    return %c0_i32, %c0_i32_0 : i32, i32
  }
  func.func @transform_9(%arg0: i32, %arg1: i32) -> (i32, i32) {
    %c0_i32 = arith.constant 0 : i32
    %c0_i32_0 = arith.constant 0 : i32
    %c0_i32_1 = arith.constant 0 : i32
    return %c0_i32, %c0_i32_0 : i32, i32
  }
  func.func @transform_10(%arg0: i32, %arg1: i32) -> (i32, i32, i32) {
    %c0_i32 = arith.constant 0 : i32
    %c0_i32_0 = arith.constant 0 : i32
    %c0_i32_1 = arith.constant 0 : i32
    return %arg0, %c0_i32, %c0_i32_0 : i32, i32, i32
  }
}

</mosaic_0001>

<llo_original>
// kernel: tpu_custom_call.1
$region0: #{tpu_custom_call.1}
  #allocation0 [shape = 'u32[]', space=smem, size = 0x4, offset = 0x4, fixed_abs, tag = 'smem constant byte address 0x4 - core index']
  #allocation1 [shape = 'u32[72,128]{1,0:T(1,128)}', space=vmem, size = 0x9000, scoped, tag = 'internal scratch']
  #allocation2 [shape = 'f32[1,1280]{1,0:T(1,128)}', space=vmem, size = 0x1400, scoped, tag = 'scratch operand']
  %s0 = inlined_call_operand.vmem [shape: bf16[2,32,512], index: 0, kind: input, shape index: {}]
  %s1 = inlined_call_operand.vmem [shape: bf16[32,32], index: 1, kind: input, shape index: {}]
  %s2 = inlined_call_operand.vmem [shape: f32[1,32], index: 2, kind: input, shape index: {}]
  %s3 = inlined_call_operand.vmem [shape: bf16[32,1280], index: 3, kind: input, shape index: {}]
  %s4 = inlined_call_operand.vmem [shape: f32[1,1280], index: 4, kind: input, shape index: {}]
  %s5 = inlined_call_operand.vmem [shape: f32[1,1280], index: 5, kind: input, shape index: {}]
  %s6 = inlined_call_operand.vmem [shape: f32[1,1280], index: 6, kind: input, shape index: {}]
  %s7 = inlined_call_operand.vmem [shape: f32[1280,5], index: 7, kind: input, shape index: {}]
  %s8 = inlined_call_operand.vmem [shape: f32[1,5], index: 8, kind: input, shape index: {}]
  %s9 = inlined_call_operand.vmem [shape: f32[2,5], index: 9, kind: input, shape index: {}]
  %s10 = inlined_call_operand.hbm [shape: f32[2,1,15], index: 10, kind: output, shape index: {}]
  %s11 = sld [smem:[#allocation0]]
  $region119: #{tpu_custom_call.1} parent=0
    _
  %s13 = ssub.s32 1, %s11
  %s14 = scalar_select 0, %s13, %s11
  $region1: #{tpu_custom_call.1} parent=0
    #allocation3 [shape = 'u8[32768]{0}', space=vmem, size = 0x8000, scoped, tag = 'input window, operand 0']
    #allocation4 [shape = 'u8[1024]{0}', space=vmem, size = 0x400, scoped, tag = 'output window, operand 0']
    #allocation5 [shape = 's32[2]{0}', space=sflag, size = 0x8, scoped, tag = 'scoped memory for tpu_custom_call.1']
    %15 = vsyncpa [#allocation5], 0
    %s16 = scalar_lea.sflag [#allocation5], 1
    %17 = vsyncpa %s16, 0
    loop: start=0, step=1, limit=6
    $region2: #{tpu_custom_call.1} parent=1 // loop_pre_header
      _
    $region3: #{tpu_custom_call.1} parent=1 // loop_header
      %s19 = sphi 0, %s23
      %p20 = scmp.ge.s32.totalorder %s19, 6
      %s26 = sphi 0, %s38
      %s27 = sphi 0, %s34
      %s28 = sphi 0, %s26
      %s29 = sphi 0, %s27
      %s30 = sphi 0, %s28
      %s31 = sphi 0, %s29
      %s43 = sphi 0, %s45
      %s46 = sphi 0, %s43
      %s47 = sphi 0, %s46
      %s63 = sphi 0, %s47
      %s67 = sphi 0, %s67
      %s69 = sphi 0, %s67
      %s70 = sphi 0, %s69
      %s84 = sphi 0, %s70
      %s88 = sphi 0, %s88
      %s90 = sphi 0, %s88
      %s91 = sphi 0, %s90
      %s105 = sphi 0, %s91
      %s109 = sphi 0, %s109
      %s111 = sphi 0, %s109
      %s112 = sphi 0, %s111
      %s126 = sphi 0, %s112
      %s130 = sphi 0, %s130
      %s132 = sphi 0, %s130
      %s133 = sphi 0, %s132
      %s147 = sphi 0, %s133
      %s151 = sphi 0, %s151
      %s153 = sphi 0, %s151
      %s154 = sphi 0, %s153
      %s168 = sphi 0, %s154
      %s172 = sphi 0, %s172
      %s174 = sphi 0, %s172
      %s175 = sphi 0, %s174
      %s189 = sphi 0, %s175
      %s193 = sphi 0, %s193
      %s195 = sphi 0, %s193
      %s196 = sphi 0, %s195
      %s210 = sphi 0, %s196
      %s214 = sphi 0, %s214
      %s216 = sphi 0, %s214
      %s217 = sphi 0, %s216
      %s231 = sphi 0, %s217
      %s235 = sphi 0, %s235
      %s237 = sphi 0, %s235
      %s238 = sphi 0, %s237
      %s252 = sphi 0, %s238
      %s258 = sphi 0, %s260
      %s261 = sphi 0, %s258
      %s262 = sphi 0, %s261
      %s278 = sphi 0, %s262
    $region4: #{tpu_custom_call.1} parent=1 // loop_header_branch
      %22 = sbr.rel (%p20) target = $region8
    $region5: #{tpu_custom_call.1} parent=1 // loop_body
      %s24 = ssub.s32 %s19, 1
      %s25 = ssub.s32 %s19, 2
      %s32 = sadd.s32 1, %s27
      %p33 = scmp.ge.s32.totalorder %s32, 2
      %s34 = scalar_select %p33, 0, %s32
      %s35 = sadd.s32 1, %s26
      %s36 = scalar_select %p33, %s35, %s26
      %p37 = scmp.ge.s32.totalorder %s36, 2
      %s38 = scalar_select %p37, 0, %s36
      %s39 = ssub.s32 %s26, %s38
      %s40 = ssub.s32 %s27, %s34
      %s41 = sor.u32 %s39, %s40
      %p42 = scmp.eq.s32.totalorder %s41, 0
      %s44 = sadd.s32 %s43, 1
      %s45 = scalar_select %p42, %s43, %s44
      %p48 = pneg %p42
      %p49 = scmp.eq.s32.totalorder %s19, 3
      %p50 = por %p48, %p49
      %p51 = scmp.ne.s32.totalorder %s43, %s46
      %p52 = scmp.eq.s32.totalorder %s19, 0
      %p53 = por %p51, %p52
      %p54 = scmp.ne.s32.totalorder %s43, %s46
      %p55 = scmp.eq.s32.totalorder %s24, 3
      %p56 = por %p54, %p55
      %p57 = scmp.ne.s32.totalorder %s46, %s47
      %p58 = scmp.eq.s32.totalorder %s24, 0
      %p59 = por %p57, %p58
      %p60 = scmp.ne.s32.totalorder %s46, %s47
      %p61 = scmp.eq.s32.totalorder %s25, 3
      %p62 = por %p60, %p61
      %p64 = scmp.ne.s32.totalorder %s47, %s63
      %p65 = scmp.eq.s32.totalorder %s25, 0
      %p66 = por %p64, %p65
      %s68 = sadd.s32 %s67, 1
      %p71 = scmp.eq.s32.totalorder %s19, 3
      %p72 = scmp.ne.s32.totalorder %s67, %s69
      %p73 = scmp.eq.s32.totalorder %s19, 0
      %p74 = por %p72, %p73
      %p75 = scmp.ne.s32.totalorder %s67, %s69
      %p76 = scmp.eq.s32.totalorder %s24, 3
      %p77 = por %p75, %p76
      %p78 = scmp.ne.s32.totalorder %s69, %s70
      %p79 = scmp.eq.s32.totalorder %s24, 0
      %p80 = por %p78, %p79
      %p81 = scmp.ne.s32.totalorder %s69, %s70
      %p82 = scmp.eq.s32.totalorder %s25, 3
      %p83 = por %p81, %p82
      %p85 = scmp.ne.s32.totalorder %s70, %s84
      %p86 = scmp.eq.s32.totalorder %s25, 0
      %p87 = por %p85, %p86
      %s89 = sadd.s32 %s88, 1
      %p92 = scmp.eq.s32.totalorder %s19, 3
      %p93 = scmp.ne.s32.totalorder %s88, %s90
      %p94 = scmp.eq.s32.totalorder %s19, 0
      %p95 = por %p93, %p94
      %p96 = scmp.ne.s32.totalorder %s88, %s90
      %p97 = scmp.eq.s32.totalorder %s24, 3
      %p98 = por %p96, %p97
      %p99 = scmp.ne.s32.totalorder %s90, %s91
      %p100 = scmp.eq.s32.totalorder %s24, 0
      %p101 = por %p99, %p100
      %p102 = scmp.ne.s32.totalorder %s90, %s91
      %p103 = scmp.eq.s32.totalorder %s25, 3
      %p104 = por %p102, %p103
      %p106 = scmp.ne.s32.totalorder %s91, %s105
      %p107 = scmp.eq.s32.totalorder %s25, 0
      %p108 = por %p106, %p107
      %s110 = sadd.s32 %s109, 1
      %p113 = scmp.eq.s32.totalorder %s19, 3
      %p114 = scmp.ne.s32.totalorder %s109, %s111
      %p115 = scmp.eq.s32.totalorder %s19, 0
      %p116 = por %p114, %p115
      %p117 = scmp.ne.s32.totalorder %s109, %s111
      %p118 = scmp.eq.s32.totalorder %s24, 3
      %p119 = por %p117, %p118
      %p120 = scmp.ne.s32.totalorder %s111, %s112
      %p121 = scmp.eq.s32.totalorder %s24, 0
      %p122 = por %p120, %p121
      %p123 = scmp.ne.s32.totalorder %s111, %s112
      %p124 = scmp.eq.s32.totalorder %s25, 3
      %p125 = por %p123, %p124
      %p127 = scmp.ne.s32.totalorder %s112, %s126
      %p128 = scmp.eq.s32.totalorder %s25, 0
      %p129 = por %p127, %p128
      %s131 = sadd.s32 %s130, 1
      %p134 = scmp.eq.s32.totalorder %s19, 3
      %p135 = scmp.ne.s32.totalorder %s130, %s132
      %p136 = scmp.eq.s32.totalorder %s19, 0
      %p137 = por %p135, %p136
      %p138 = scmp.ne.s32.totalorder %s130, %s132
      %p139 = scmp.eq.s32.totalorder %s24, 3
      %p140 = por %p138, %p139
      %p141 = scmp.ne.s32.totalorder %s132, %s133
      %p142 = scmp.eq.s32.totalorder %s24, 0
      %p143 = por %p141, %p142
      %p144 = scmp.ne.s32.totalorder %s132, %s133
      %p145 = scmp.eq.s32.totalorder %s25, 3
      %p146 = por %p144, %p145
      %p148 = scmp.ne.s32.totalorder %s133, %s147
      %p149 = scmp.eq.s32.totalorder %s25, 0
      %p150 = por %p148, %p149
      %s152 = sadd.s32 %s151, 1
      %p155 = scmp.eq.s32.totalorder %s19, 3
      %p156 = scmp.ne.s32.totalorder %s151, %s153
      %p157 = scmp.eq.s32.totalorder %s19, 0
      %p158 = por %p156, %p157
      %p159 = scmp.ne.s32.totalorder %s151, %s153
      %p160 = scmp.eq.s32.totalorder %s24, 3
      %p161 = por %p159, %p160
      %p162 = scmp.ne.s32.totalorder %s153, %s154
      %p163 = scmp.eq.s32.totalorder %s24, 0
      %p164 = por %p162, %p163
      %p165 = scmp.ne.s32.totalorder %s153, %s154
      %p166 = scmp.eq.s32.totalorder %s25, 3
      %p167 = por %p165, %p166
      %p169 = scmp.ne.s32.totalorder %s154, %s168
      %p170 = scmp.eq.s32.totalorder %s25, 0
      %p171 = por %p169, %p170
      %s173 = sadd.s32 %s172, 1
      %p176 = scmp.eq.s32.totalorder %s19, 3
      %p177 = scmp.ne.s32.totalorder %s172, %s174
      %p178 = scmp.eq.s32.totalorder %s19, 0
      %p179 = por %p177, %p178
      %p180 = scmp.ne.s32.totalorder %s172, %s174
      %p181 = scmp.eq.s32.totalorder %s24, 3
      %p182 = por %p180, %p181
      %p183 = scmp.ne.s32.totalorder %s174, %s175
      %p184 = scmp.eq.s32.totalorder %s24, 0
      %p185 = por %p183, %p184
      %p186 = scmp.ne.s32.totalorder %s174, %s175
      %p187 = scmp.eq.s32.totalorder %s25, 3
      %p188 = por %p186, %p187
      %p190 = scmp.ne.s32.totalorder %s175, %s189
      %p191 = scmp.eq.s32.totalorder %s25, 0
      %p192 = por %p190, %p191
      %s194 = sadd.s32 %s193, 1
      %p197 = scmp.eq.s32.totalorder %s19, 3
      %p198 = scmp.ne.s32.totalorder %s193, %s195
      %p199 = scmp.eq.s32.totalorder %s19, 0
      %p200 = por %p198, %p199
      %p201 = scmp.ne.s32.totalorder %s193, %s195
      %p202 = scmp.eq.s32.totalorder %s24, 3
      %p203 = por %p201, %p202
      %p204 = scmp.ne.s32.totalorder %s195, %s196
      %p205 = scmp.eq.s32.totalorder %s24, 0
      %p206 = por %p204, %p205
      %p207 = scmp.ne.s32.totalorder %s195, %s196
      %p208 = scmp.eq.s32.totalorder %s25, 3
      %p209 = por %p207, %p208
      %p211 = scmp.ne.s32.totalorder %s196, %s210
      %p212 = scmp.eq.s32.totalorder %s25, 0
      %p213 = por %p211, %p212
      %s215 = sadd.s32 %s214, 1
      %p218 = scmp.eq.s32.totalorder %s19, 3
      %p219 = scmp.ne.s32.totalorder %s214, %s216
      %p220 = scmp.eq.s32.totalorder %s19, 0
      %p221 = por %p219, %p220
      %p222 = scmp.ne.s32.totalorder %s214, %s216
      %p223 = scmp.eq.s32.totalorder %s24, 3
      %p224 = por %p222, %p223
      %p225 = scmp.ne.s32.totalorder %s216, %s217
      %p226 = scmp.eq.s32.totalorder %s24, 0
      %p227 = por %p225, %p226
      %p228 = scmp.ne.s32.totalorder %s216, %s217
      %p229 = scmp.eq.s32.totalorder %s25, 3
      %p230 = por %p228, %p229
      %p232 = scmp.ne.s32.totalorder %s217, %s231
      %p233 = scmp.eq.s32.totalorder %s25, 0
      %p234 = por %p232, %p233
      %s236 = sadd.s32 %s235, 1
      %p239 = scmp.eq.s32.totalorder %s19, 3
      %p240 = scmp.ne.s32.totalorder %s235, %s237
      %p241 = scmp.eq.s32.totalorder %s19, 0
      %p242 = por %p240, %p241
      %p243 = scmp.ne.s32.totalorder %s235, %s237
      %p244 = scmp.eq.s32.totalorder %s24, 3
      %p245 = por %p243, %p244
      %p246 = scmp.ne.s32.totalorder %s237, %s238
      %p247 = scmp.eq.s32.totalorder %s24, 0
      %p248 = por %p246, %p247
      %p249 = scmp.ne.s32.totalorder %s237, %s238
      %p250 = scmp.eq.s32.totalorder %s25, 3
      %p251 = por %p249, %p250
      %p253 = scmp.ne.s32.totalorder %s238, %s252
      %p254 = scmp.eq.s32.totalorder %s25, 0
      %p255 = por %p253, %p254
      %s256 = ssub.s32 %s26, %s38
      %p257 = scmp.eq.s32.totalorder %s256, 0
      %s259 = sadd.s32 %s258, 1
      %s260 = scalar_select %p257, %s258, %s259
      %p263 = pneg %p257
      %p264 = scmp.eq.s32.totalorder %s19, 3
      %p265 = por %p263, %p264
      %p266 = scmp.ne.s32.totalorder %s258, %s261
      %p267 = scmp.eq.s32.totalorder %s19, 0
      %p268 = por %p266, %p267
      %p269 = scmp.ne.s32.totalorder %s258, %s261
      %p270 = scmp.eq.s32.totalorder %s24, 3
      %p271 = por %p269, %p270
      %p272 = scmp.ne.s32.totalorder %s261, %s262
      %p273 = scmp.eq.s32.totalorder %s24, 0
      %p274 = por %p272, %p273
      %p275 = scmp.ne.s32.totalorder %s261, %s262
      %p276 = scmp.eq.s32.totalorder %s25, 3
      %p277 = por %p275, %p276
      %p279 = scmp.ne.s32.totalorder %s262, %s278
      %p280 = scmp.eq.s32.totalorder %s25, 0
      %p281 = por %p279, %p280
      %p282 = scmp.le.s32.totalorder 1, %s19
      %p283 = scmp.lt.s32.totalorder %s19, 5
      %p284 = pnand %p282, %p283
      %p285 = pneg %p284
      // Predicated region
      $region9: #{tpu_custom_call.1} parent=5 // pred_check
        _
      $region10: #{tpu_custom_call.1} parent=5 // pred_check_branch
        %287 = sbr.rel (%p284) target = $region12
      $region11: #{tpu_custom_call.1} parent=5 // pred_region
        %s288 = ssub.s32 %s19, 1
        // Predicated region
        $region13: #{tpu_custom_call.1} parent=11 // pred_check
          %p289 = pneg %p80
        $region14: #{tpu_custom_call.1} parent=11 // pred_check_branch
          %291 = sbr.rel (%p289) target = $region16
        $region15: #{tpu_custom_call.1} parent=11 // pred_region
          _
        $region16: #{tpu_custom_call.1} parent=11 // pred_fallthru
          _
        // Predicated region
        $region17: #{tpu_custom_call.1} parent=11 // pred_check
          %p292 = pneg %p101
        $region18: #{tpu_custom_call.1} parent=11 // pred_check_branch
          %294 = sbr.rel (%p292) target = $region20
        $region19: #{tpu_custom_call.1} parent=11 // pred_region
          _
        $region20: #{tpu_custom_call.1} parent=11 // pred_fallthru
          _
        // Predicated region
        $region21: #{tpu_custom_call.1} parent=11 // pred_check
          %p295 = pneg %p122
        $region22: #{tpu_custom_call.1} parent=11 // pred_check_branch
          %297 = sbr.rel (%p295) target = $region24
        $region23: #{tpu_custom_call.1} parent=11 // pred_region
          _
        $region24: #{tpu_custom_call.1} parent=11 // pred_fallthru
          _
        // Predicated region
        $region25: #{tpu_custom_call.1} parent=11 // pred_check
          %p298 = pneg %p143
        $region26: #{tpu_custom_call.1} parent=11 // pred_check_branch
          %300 = sbr.rel (%p298) target = $region28
        $region27: #{tpu_custom_call.1} parent=11 // pred_region
          _
        $region28: #{tpu_custom_call.1} parent=11 // pred_fallthru
          _
        // Predicated region
        $region29: #{tpu_custom_call.1} parent=11 // pred_check
          %p301 = pneg %p164
        $region30: #{tpu_custom_call.1} parent=11 // pred_check_branch
          %303 = sbr.rel (%p301) target = $region32
        $region31: #{tpu_custom_call.1} parent=11 // pred_region
          _
        $region32: #{tpu_custom_call.1} parent=11 // pred_fallthru
          _
        // Predicated region
        $region33: #{tpu_custom_call.1} parent=11 // pred_check
          %p304 = pneg %p185
        $region34: #{tpu_custom_call.1} parent=11 // pred_check_branch
          %306 = sbr.rel (%p304) target = $region36
        $region35: #{tpu_custom_call.1} parent=11 // pred_region
          _
        $region36: #{tpu_custom_call.1} parent=11 // pred_fallthru
          _
        // Predicated region
        $region37: #{tpu_custom_call.1} parent=11 // pred_check
          %p307 = pneg %p206
        $region38: #{tpu_custom_call.1} parent=11 // pred_check_branch
          %309 = sbr.rel (%p307) target = $region40
        $region39: #{tpu_custom_call.1} parent=11 // pred_region
          _
        $region40: #{tpu_custom_call.1} parent=11 // pred_fallthru
          _
        // Predicated region
        $region41: #{tpu_custom_call.1} parent=11 // pred_check
          %p310 = pneg %p227
        $region42: #{tpu_custom_call.1} parent=11 // pred_check_branch
          %312 = sbr.rel (%p310) target = $region44
        $region43: #{tpu_custom_call.1} parent=11 // pred_region
          _
        $region44: #{tpu_custom_call.1} parent=11 // pred_fallthru
          _
        // Predicated region
        $region45: #{tpu_custom_call.1} parent=11 // pred_check
          %p313 = pneg %p248
        $region46: #{tpu_custom_call.1} parent=11 // pred_check_branch
          %315 = sbr.rel (%p313) target = $region48
        $region47: #{tpu_custom_call.1} parent=11 // pred_region
          _
        $region48: #{tpu_custom_call.1} parent=11 // pred_fallthru
          _
      $region12: #{tpu_custom_call.1} parent=5 // pred_fallthru
        _
      %p316 = scmp.lt.s32.totalorder %s19, 4
      // Predicated region
      $region49: #{tpu_custom_call.1} parent=5 // pred_check
        %p317 = pneg %p316
      $region50: #{tpu_custom_call.1} parent=5 // pred_check_branch
        %319 = sbr.rel (%p317) target = $region52
      $region51: #{tpu_custom_call.1} parent=5 // pred_region
        // Predicated region
        $region53: #{tpu_custom_call.1} parent=51 // pred_check
          %p320 = pneg %p53
        $region54: #{tpu_custom_call.1} parent=51 // pred_check_branch
          %322 = sbr.rel (%p320) target = $region56
        $region55: #{tpu_custom_call.1} parent=51 // pred_region
          %s323 = sand.u32 %s43, 1
          %s324 = sand.u32 %s43, 1
          %s325 = smul.addr %s324, 32
          %s326 = scalar_lea.vmem [#allocation3], %s325
          %s327 = smul.u32 2, %s27
          %s328 = smul.addr %s26, 16
          %s329 = sadd.s32 %s327, %s328
          %s330 = smul.addr %s329, 4
          %s331 = scalar_lea.vmem %s0, %s330
          // Predicated region
          $region57: #{tpu_custom_call.1} parent=55 // pred_check
            _
          $region58: #{tpu_custom_call.1} parent=55 // pred_check_branch
            %333 = sbr.rel (0) target = $region60
          $region59: #{tpu_custom_call.1} parent=55 // pred_region
            // Predicated region
            $region61: #{tpu_custom_call.1} parent=59 // pred_check
              _
            $region62: #{tpu_custom_call.1} parent=59 // pred_check_branch
              %335 = sbr.rel (0) target = $region64
            $region63: #{tpu_custom_call.1} parent=59 // pred_region
              // Predicated region
              $region76: #{tpu_custom_call.1} parent=63 // pred_check
                _
              $region77: #{tpu_custom_call.1} parent=63 // pred_check_branch
                %357 = sbr.rel (0) target = $region79
              $region78: #{tpu_custom_call.1} parent=63 // pred_region
                loop: start=0, step=1, limit=1
                $region80: #{tpu_custom_call.1} parent=78 // loop_pre_header
                  _
                $region81: #{tpu_custom_call.1} parent=78 // loop_header
                  %s359 = sphi 0, %s363
                  %p360 = scmp.ge.s32.totalorder %s359, 1
                  %s364 = sphi %s331, %s331
                  %s365 = sphi %s326, %s326
                $region82: #{tpu_custom_call.1} parent=78 // loop_header_branch
                  %362 = sbr.rel (%p360) target = $region86
                $region83: #{tpu_custom_call.1} parent=78 // loop_body
                  %v366 = vld [vmem:[%s364] sm:$0xff]
                  %367 = vst [vmem:[%s365] sm:$0xff] %v366
                  %v368 = vld [vmem:[%s364 + $0x10] sm:$0xff]
                  %369 = vst [vmem:[%s365 + $0x8] sm:$0xff] %v368
                  %v370 = vld [vmem:[%s364 + $0x20] sm:$0xff]
                  %371 = vst [vmem:[%s365 + $0x10] sm:$0xff] %v370
                  %v372 = vld [vmem:[%s364 + $0x30] sm:$0xff]
                  %373 = vst [vmem:[%s365 + $0x18] sm:$0xff] %v372
                $region84: #{tpu_custom_call.1} parent=78 // loop_footer
                  %s363 = sadd.s32 1, %s359
                $region85: #{tpu_custom_call.1} parent=78 // loop_footer_branch
                  %358 = sbr.rel target = $region81
                $region86: #{tpu_custom_call.1} parent=78 // loop_exit
                  _
              $region79: #{tpu_custom_call.1} parent=63 // pred_fallthru
                _
              // Predicated region
              $region87: #{tpu_custom_call.1} parent=63 // pred_check
                _
              $region88: #{tpu_custom_call.1} parent=63 // pred_check_branch
                %375 = sbr.rel target = $region90
              $region89: #{tpu_custom_call.1} parent=63 // pred_region
                _
              $region90: #{tpu_custom_call.1} parent=63 // pred_fallthru
                _
            $region64: #{tpu_custom_call.1} parent=59 // pred_fallthru
              _
            // Predicated region
            $region65: #{tpu_custom_call.1} parent=59 // pred_check
              _
            $region66: #{tpu_custom_call.1} parent=59 // pred_check_branch
              %337 = sbr.rel target = $region68
            $region67: #{tpu_custom_call.1} parent=59 // pred_region
              %s339 = ssub.s32 256, 1
              loop: start=0, step=1, limit=1
              $region69: #{tpu_custom_call.1} parent=67 // loop_pre_header
                _
              $region70: #{tpu_custom_call.1} parent=67 // loop_header
                %s341 = sphi 0, %s345
                %p342 = scmp.ge.s32.totalorder %s341, 1
                %s346 = sphi %s331, %s331
                %s347 = sphi %s326, %s326
              $region71: #{tpu_custom_call.1} parent=67 // loop_header_branch
                %344 = sbr.rel (%p342) target = $region75
              $region72: #{tpu_custom_call.1} parent=67 // loop_body
                %v348 = vld [vmem:[%s346] sm:%s339]
                %349 = vst [vmem:[%s347] sm:%s339] %v348
                %v350 = vld [vmem:[%s346 + $0x10] sm:%s339]
                %351 = vst [vmem:[%s347 + $0x8] sm:%s339] %v350
                %v352 = vld [vmem:[%s346 + $0x20] sm:%s339]
                %353 = vst [vmem:[%s347 + $0x10] sm:%s339] %v352
                %v354 = vld [vmem:[%s346 + $0x30] sm:%s339]
                %355 = vst [vmem:[%s347 + $0x18] sm:%s339] %v354
              $region73: #{tpu_custom_call.1} parent=67 // loop_footer
                %s345 = sadd.s32 1, %s341
              $region74: #{tpu_custom_call.1} parent=67 // loop_footer_branch
                %340 = sbr.rel target = $region70
              $region75: #{tpu_custom_call.1} parent=67 // loop_exit
                _
            $region68: #{tpu_custom_call.1} parent=59 // pred_fallthru
              _
          $region60: #{tpu_custom_call.1} parent=55 // pred_fallthru
            _
          %376 = vnop
        $region56: #{tpu_custom_call.1} parent=51 // pred_fallthru
          _
      $region52: #{tpu_custom_call.1} parent=5 // pred_fallthru
        _
      %p377 = scmp.le.s32.totalorder 1, %s19
      %p378 = scmp.lt.s32.totalorder %s19, 5
      %p379 = pnand %p377, %p378
      %p380 = pneg %p379
      // Predicated region
      $region91: #{tpu_custom_call.1} parent=5 // pred_check
        _
      $region92: #{tpu_custom_call.1} parent=5 // pred_check_branch
        %382 = sbr.rel (%p379) target = $region94
      $region93: #{tpu_custom_call.1} parent=5 // pred_region
        %s383 = ssub.s32 %s19, 1
        %s384 = sand.u32 %s46, 1
        %s385 = sand.u32 %s46, 1
        %s386 = smul.addr %s385, 32
        %s387 = scalar_lea.vmem [#allocation3], %s386
        // Predicated region
        $region95: #{tpu_custom_call.1} parent=93 // pred_check
          %p388 = pneg %p59
        $region96: #{tpu_custom_call.1} parent=93 // pred_check_branch
          %390 = sbr.rel (%p388) target = $region98
        $region97: #{tpu_custom_call.1} parent=93 // pred_region
          _
        $region98: #{tpu_custom_call.1} parent=93 // pred_fallthru
          _
        %s391 = sand.u32 %s46, 1
        %s392 = sand.u32 %s46, 1
        %s393 = smul.addr %s392, 32
        %s394 = scalar_lea.vmem [#allocation3], %s393
        %p395 = pneg %p59
        %p396 = pneg %p56
        %p397 = pneg %p80
        %p398 = pneg %p77
        %p399 = pneg %p101
        %p400 = pneg %p98
        %p401 = pneg %p122
        %p402 = pneg %p119
        %p403 = pneg %p143
        %p404 = pneg %p140
        %p405 = pneg %p164
        %p406 = pneg %p161
        %p407 = pneg %p185
        %p408 = pneg %p182
        %p409 = pneg %p206
        %p410 = pneg %p203
        %p411 = pneg %p227
        %p412 = pneg %p224
        %p413 = pneg %p248
        %p414 = pneg %p245
        %p415 = pneg %p274
        %p416 = pneg %p271
        %s417 = sand.u32 %s261, 1
        %s418 = scalar_lea.sflag [#allocation5], %s417
        %s419 = sand.u32 %s261, 1
        %s420 = scalar_lea.vmem [#allocation4], %s419
        %s421 = smul.u32 2, %s29
        %p423 = scmp.eq.s32.totalorder %s29, 0
        // Predicated region
        $region99: #{tpu_custom_call.1} parent=93 // pred_check
          %p424 = pneg %p423
        $region100: #{tpu_custom_call.1} parent=93 // pred_check_branch
          %426 = sbr.rel (%p424) target = $region102
        $region101: #{tpu_custom_call.1} parent=93 // pred_region
          %427 = vst [vmem:[#allocation2] sm:$0xff] -inf
          %v428 = vlaneseq
          %vm429 = vcmp.ge.s32.totalorder %v428, 0
          %vm430 = vcmp.lt.s32.totalorder %v428, 256
          %vm431 = vmand %vm429, %vm430
          %432 = vst.msk [vmem:[#allocation2 + $0x8] sm:$0x3] %vm431, -inf
        $region102: #{tpu_custom_call.1} parent=93 // pred_fallthru
          _
        %v433 = vld [vmem:[%s387] sm:$0xff]
        %v434 = vld [vmem:[%s387 + $0x8] sm:$0xff]
        %v435 = vld [vmem:[%s387 + $0x10] sm:$0xff]
        %v436 = vld [vmem:[%s387 + $0x18] sm:$0xff]
        %v437 = vld [vmem:[%s1] sm:$0xf]
        %v438 = vld [vmem:[%s1 + $0x4] sm:$0xf]
        %v439 = vld [vmem:[%s1 + $0x8] sm:$0xf]
        %v440 = vld [vmem:[%s1 + $0xc] sm:$0xf]
        %v441 = vld [vmem:[%s2] sm:$0x1]
        %v443 = vperm.slane %v441, 0
        %v449 = vunpack.c.l.b16 %v433
        %v450 = vunpack.c.h.b16 %v433
        %v451 = vunpack.c.l.b16 %v434
        %v452 = vunpack.c.h.b16 %v434
        %v453 = vunpack.c.l.b16 %v435
        %v454 = vunpack.c.h.b16 %v435
        %v455 = vunpack.c.l.b16 %v436
        %v456 = vunpack.c.h.b16 %v436
        %v457 = vpack.c.b16 %v451, %v449
        %v458 = vpack.c.b16 %v452, %v450
        %v459 = vpack.c.b16 %v455, %v453
        %v460 = vpack.c.b16 %v456, %v454
        %465 = vxpose.binary.xlu0.c.b16.start [1/16] %v458, %v457, 128
        %466 = vxpose.binary.xlu0.c.b16.cont [2/16] %v460, %v459, 128
        %467 = vxpose.binary.xlu0.c.b16.cont [3/16] 0, 0, 128
        %468 = vxpose.binary.xlu0.c.b16.cont [4/16] 0, 0, 128
        %469 = vxpose.binary.xlu0.c.b16.cont [5/16] 0, 0, 128
        %470 = vxpose.binary.xlu0.c.b16.cont [6/16] 0, 0, 128
        %471 = vxpose.binary.xlu0.c.b16.cont [7/16] 0, 0, 128
        %472 = vxpose.binary.xlu0.c.b16.end [8/16] 0, 0, 128
        %v473 = vpop.trf.xlu0
        %v474 = vpop.trf.xlu0
        %v475 = vpop.trf.xlu0
        %v476 = vpop.trf.xlu0
        %v477 = vpop.trf.xlu0
        %v478 = vpop.trf.xlu0
        %v479 = vpop.trf.xlu0
        %v480 = vpop.trf.xlu0
        %v481 = vpop.trf.xlu0
        %v482 = vpop.trf.xlu0
        %v483 = vpop.trf.xlu0
        %v484 = vpop.trf.xlu0
        %v485 = vpop.trf.xlu0
        %v486 = vpop.trf.xlu0
        %v487 = vpop.trf.xlu0
        %v488 = vpop.trf.xlu0
        %v493 = vunpack.c.l.b16 %v437
        %v494 = vunpack.c.l.b16 %v438
        %v495 = vunpack.c.l.b16 %v439
        %v496 = vunpack.c.l.b16 %v440
        %v497 = vpack.c.b16 %v494, %v493
        %v498 = vpack.c.b16 %v496, %v495
        %vm501 = vcmask 261120
        %v503 = vsel %vm501, %v473, 0
        %v506 = vsel %vm501, %v475, 0
        %v509 = vsel %vm501, %v477, 0
        %v512 = vsel %vm501, %v479, 0
        %v515 = vsel %vm501, %v481, 0
        %v518 = vsel %vm501, %v483, 0
        %v521 = vsel %vm501, %v485, 0
        %v524 = vsel %vm501, %v487, 0
        %v527 = vsel %vm501, %v474, 0
        %v530 = vsel %vm501, %v476, 0
        %v533 = vsel %vm501, %v478, 0
        %v536 = vsel %vm501, %v480, 0
        %v539 = vsel %vm501, %v482, 0
        %v542 = vsel %vm501, %v484, 0
        %v545 = vsel %vm501, %v486, 0
        %v548 = vsel %vm501, %v488, 0
        %550 = vmatpush.bf16.msra.mxu0 0
        %551 = vmatpush.bf16.msra.mxu0 0
        %552 = vmatpush.bf16.msra.mxu0 0
        %553 = vmatpush.bf16.msra.mxu0 0
        %554 = vmatpush.bf16.msra.mxu0 0
        %555 = vmatpush.bf16.msra.mxu0 0
        %556 = vmatpush.bf16.msra.mxu0 %v498
        %557 = vmatpush.bf16.msra.mxu0 %v497
        %558 = vmatmul.bf16.gmra.mxu0 %v503
        %v559 = vpop.f32.mrf.mxu0
        %v560 = vadd.f32 %v443, %v559
        %v561 = vpop.f32.mrf.mxu0
        %v562 = vadd.f32 %v443, %v561
        %563 = vmatmul.bf16.gmra.mxu0 %v506
        %v564 = vpop.f32.mrf.mxu0
        %v565 = vadd.f32 %v443, %v564
        %v566 = vpop.f32.mrf.mxu0
        %v567 = vadd.f32 %v443, %v566
        %568 = vmatmul.bf16.gmra.mxu0 %v509
        %v569 = vpop.f32.mrf.mxu0
        %v570 = vadd.f32 %v443, %v569
        %v571 = vpop.f32.mrf.mxu0
        %v572 = vadd.f32 %v443, %v571
        %573 = vmatmul.bf16.gmra.mxu0 %v512
        %v574 = vpop.f32.mrf.mxu0
        %v575 = vadd.f32 %v443, %v574
        %v576 = vpop.f32.mrf.mxu0
        %v577 = vadd.f32 %v443, %v576
        %578 = vmatmul.bf16.gmra.mxu0 %v515
        %v579 = vpop.f32.mrf.mxu0
        %v580 = vadd.f32 %v443, %v579
        %v581 = vpop.f32.mrf.mxu0
        %v582 = vadd.f32 %v443, %v581
        %583 = vmatmul.bf16.gmra.mxu0 %v518
        %v584 = vpop.f32.mrf.mxu0
        %v585 = vadd.f32 %v443, %v584
        %v586 = vpop.f32.mrf.mxu0
        %v587 = vadd.f32 %v443, %v586
        %588 = vmatmul.bf16.gmra.mxu0 %v521
        %v589 = vpop.f32.mrf.mxu0
        %v590 = vadd.f32 %v443, %v589
        %v591 = vpop.f32.mrf.mxu0
        %v592 = vadd.f32 %v443, %v591
        %593 = vmatmul.bf16.gmra.mxu0 %v524
        %v594 = vpop.f32.mrf.mxu0
        %v595 = vadd.f32 %v443, %v594
        %v596 = vpop.f32.mrf.mxu0
        %v597 = vadd.f32 %v443, %v596
        %598 = vmatmul.bf16.gmra.mxu0 %v527
        %v599 = vpop.f32.mrf.mxu0
        %v600 = vadd.f32 %v443, %v599
        %v601 = vpop.f32.mrf.mxu0
        %v602 = vadd.f32 %v443, %v601
        %603 = vmatmul.bf16.gmra.mxu0 %v530
        %v604 = vpop.f32.mrf.mxu0
        %v605 = vadd.f32 %v443, %v604
        %v606 = vpop.f32.mrf.mxu0
        %v607 = vadd.f32 %v443, %v606
        %608 = vmatmul.bf16.gmra.mxu0 %v533
        %v609 = vpop.f32.mrf.mxu0
        %v610 = vadd.f32 %v443, %v609
        %v611 = vpop.f32.mrf.mxu0
        %v612 = vadd.f32 %v443, %v611
        %613 = vmatmul.bf16.gmra.mxu0 %v536
        %v614 = vpop.f32.mrf.mxu0
        %v615 = vadd.f32 %v443, %v614
        %v616 = vpop.f32.mrf.mxu0
        %v617 = vadd.f32 %v443, %v616
        %618 = vmatmul.bf16.gmra.mxu0 %v539
        %v619 = vpop.f32.mrf.mxu0
        %v620 = vadd.f32 %v443, %v619
        %v621 = vpop.f32.mrf.mxu0
        %v622 = vadd.f32 %v443, %v621
        %623 = vmatmul.bf16.gmra.mxu0 %v542
        %v624 = vpop.f32.mrf.mxu0
        %v625 = vadd.f32 %v443, %v624
        %v626 = vpop.f32.mrf.mxu0
        %v627 = vadd.f32 %v443, %v626
        %628 = vmatmul.bf16.gmra.mxu0 %v545
        %v629 = vpop.f32.mrf.mxu0
        %v630 = vadd.f32 %v443, %v629
        %v631 = vpop.f32.mrf.mxu0
        %v632 = vadd.f32 %v443, %v631
        %633 = vmatmul.bf16.gmra.mxu0 %v548
        %v634 = vpop.f32.mrf.mxu0
        %v635 = vadd.f32 %v443, %v634
        %v636 = vpop.f32.mrf.mxu0
        %v637 = vadd.f32 %v443, %v636
        %638 = vdwg.mxu0
        %v639 = vmax.f32 %v560, 0.0
        %v640 = vmax.f32 %v562, 0.0
        %v641 = vmax.f32 %v565, 0.0
        %v642 = vmax.f32 %v567, 0.0
        %v643 = vmax.f32 %v570, 0.0
        %v644 = vmax.f32 %v572, 0.0
        %v645 = vmax.f32 %v575, 0.0
        %v646 = vmax.f32 %v577, 0.0
        %v647 = vmax.f32 %v580, 0.0
        %v648 = vmax.f32 %v582, 0.0
        %v649 = vmax.f32 %v585, 0.0
        %v650 = vmax.f32 %v587, 0.0
        %v651 = vmax.f32 %v590, 0.0
        %v652 = vmax.f32 %v592, 0.0
        %v653 = vmax.f32 %v595, 0.0
        %v654 = vmax.f32 %v597, 0.0
        %v655 = vmax.f32 %v600, 0.0
        %v656 = vmax.f32 %v602, 0.0
        %v657 = vmax.f32 %v605, 0.0
        %v658 = vmax.f32 %v607, 0.0
        %v659 = vmax.f32 %v610, 0.0
        %v660 = vmax.f32 %v612, 0.0
        %v661 = vmax.f32 %v615, 0.0
        %v662 = vmax.f32 %v617, 0.0
        %v663 = vmax.f32 %v620, 0.0
        %v664 = vmax.f32 %v622, 0.0
        %v665 = vmax.f32 %v625, 0.0
        %v666 = vmax.f32 %v627, 0.0
        %v667 = vmax.f32 %v630, 0.0
        %v668 = vmax.f32 %v632, 0.0
        %v669 = vmax.f32 %v635, 0.0
        %v670 = vmax.f32 %v637, 0.0
        %v671 = vmin.f32 %v639, 6.0
        %v672 = vmin.f32 %v640, 6.0
        %v673 = vmin.f32 %v641, 6.0
        %v674 = vmin.f32 %v642, 6.0
        %v675 = vmin.f32 %v643, 6.0
        %v676 = vmin.f32 %v644, 6.0
        %v677 = vmin.f32 %v645, 6.0
        %v678 = vmin.f32 %v646, 6.0
        %v679 = vmin.f32 %v647, 6.0
        %v680 = vmin.f32 %v648, 6.0
        %v681 = vmin.f32 %v649, 6.0
        %v682 = vmin.f32 %v650, 6.0
        %v683 = vmin.f32 %v651, 6.0
        %v684 = vmin.f32 %v652, 6.0
        %v685 = vmin.f32 %v653, 6.0
        %v686 = vmin.f32 %v654, 6.0
        %v687 = vmin.f32 %v655, 6.0
        %v688 = vmin.f32 %v656, 6.0
        %v689 = vmin.f32 %v657, 6.0
        %v690 = vmin.f32 %v658, 6.0
        %v691 = vmin.f32 %v659, 6.0
        %v692 = vmin.f32 %v660, 6.0
        %v693 = vmin.f32 %v661, 6.0
        %v694 = vmin.f32 %v662, 6.0
        %v695 = vmin.f32 %v663, 6.0
        %v696 = vmin.f32 %v664, 6.0
        %v697 = vmin.f32 %v665, 6.0
        %v698 = vmin.f32 %v666, 6.0
        %v699 = vmin.f32 %v667, 6.0
        %v700 = vmin.f32 %v668, 6.0
        %v701 = vmin.f32 %v669, 6.0
        %v702 = vmin.f32 %v670, 6.0
        %v703 = vpack.c.bf16 %v672, %v671
        %v704 = vpack.c.bf16 %v674, %v673
        %v705 = vpack.c.bf16 %v676, %v675
        %v706 = vpack.c.bf16 %v678, %v677
        %v707 = vpack.c.bf16 %v680, %v679
        %v708 = vpack.c.bf16 %v682, %v681
        %v709 = vpack.c.bf16 %v684, %v683
        %v710 = vpack.c.bf16 %v686, %v685
        %v711 = vpack.c.bf16 %v688, %v687
        %v712 = vpack.c.bf16 %v690, %v689
        %v713 = vpack.c.bf16 %v692, %v691
        %v714 = vpack.c.bf16 %v694, %v693
        %v715 = vpack.c.bf16 %v696, %v695
        %v716 = vpack.c.bf16 %v698, %v697
        %v717 = vpack.c.bf16 %v700, %v699
        %v718 = vpack.c.bf16 %v702, %v701
        %v719 = vld [vmem:[%s3] sm:$0xff]
        %v720 = vld [vmem:[%s3 + $0x28] sm:$0xff]
        %v721 = vld [vmem:[%s3 + $0x50] sm:$0xff]
        %v722 = vld [vmem:[%s3 + $0x78] sm:$0xff]
        %v727 = vunpack.c.l.b16 %v719
        %v728 = vunpack.c.h.b16 %v719
        %v729 = vunpack.c.l.b16 %v720
        %v730 = vunpack.c.h.b16 %v720
        %v731 = vunpack.c.l.b16 %v721
        %v732 = vunpack.c.h.b16 %v721
        %v733 = vunpack.c.l.b16 %v722
        %v734 = vunpack.c.h.b16 %v722
        %v735 = vpack.c.b16 %v729, %v727
        %v736 = vpack.c.b16 %v730, %v728
        %v737 = vpack.c.b16 %v733, %v731
        %v738 = vpack.c.b16 %v734, %v732
        %v744 = vsel %vm501, %v703, 0
        %v747 = vsel %vm501, %v704, 0
        %v750 = vsel %vm501, %v705, 0
        %v753 = vsel %vm501, %v706, 0
        %v756 = vsel %vm501, %v707, 0
        %v759 = vsel %vm501, %v708, 0
        %v762 = vsel %vm501, %v709, 0
        %v765 = vsel %vm501, %v710, 0
        %v768 = vsel %vm501, %v711, 0
        %v771 = vsel %vm501, %v712, 0
        %v774 = vsel %vm501, %v713, 0
        %v777 = vsel %vm501, %v714, 0
        %v780 = vsel %vm501, %v715, 0
        %v783 = vsel %vm501, %v716, 0
        %v786 = vsel %vm501, %v717, 0
        %v789 = vsel %vm501, %v718, 0
        %791 = vmatpush.bf16.msra.mxu0 0
        %792 = vmatpush.bf16.msra.mxu0 0
        %793 = vmatpush.bf16.msra.mxu0 0
        %794 = vmatpush.bf16.msra.mxu0 0
        %795 = vmatpush.bf16.msra.mxu0 0
        %796 = vmatpush.bf16.msra.mxu0 0
        %797 = vmatpush.bf16.msra.mxu0 %v737
        %798 = vmatpush.bf16.msra.mxu0 %v735
        %799 = vmatmul.bf16.gmra.mxu0 %v744
        %v800 = vpop.f32.mrf.mxu0
        %v801 = vadd.f32 0.0, %v800
        %v802 = vpop.f32.mrf.mxu0
        %v803 = vadd.f32 0.0, %v802
        %804 = vmatmul.bf16.gmra.mxu0 %v747
        %v805 = vpop.f32.mrf.mxu0
        %v806 = vadd.f32 0.0, %v805
        %v807 = vpop.f32.mrf.mxu0
        %v808 = vadd.f32 0.0, %v807
        %809 = vmatmul.bf16.gmra.mxu0 %v750
        %v810 = vpop.f32.mrf.mxu0
        %v811 = vadd.f32 0.0, %v810
        %v812 = vpop.f32.mrf.mxu0
        %v813 = vadd.f32 0.0, %v812
        %814 = vmatmul.bf16.gmra.mxu0 %v753
        %v815 = vpop.f32.mrf.mxu0
        %v816 = vadd.f32 0.0, %v815
        %v817 = vpop.f32.mrf.mxu0
        %v818 = vadd.f32 0.0, %v817
        %819 = vmatmul.bf16.gmra.mxu0 %v756
        %v820 = vpop.f32.mrf.mxu0
        %v821 = vadd.f32 0.0, %v820
        %v822 = vpop.f32.mrf.mxu0
        %v823 = vadd.f32 0.0, %v822
        %824 = vmatmul.bf16.gmra.mxu0 %v759
        %v825 = vpop.f32.mrf.mxu0
        %v826 = vadd.f32 0.0, %v825
        %v827 = vpop.f32.mrf.mxu0
        %v828 = vadd.f32 0.0, %v827
        %829 = vmatmul.bf16.gmra.mxu0 %v762
        %v830 = vpop.f32.mrf.mxu0
        %v831 = vadd.f32 0.0, %v830
        %v832 = vpop.f32.mrf.mxu0
        %v833 = vadd.f32 0.0, %v832
        %834 = vmatmul.bf16.gmra.mxu0 %v765
        %v835 = vpop.f32.mrf.mxu0
        %v836 = vadd.f32 0.0, %v835
        %v837 = vpop.f32.mrf.mxu0
        %v838 = vadd.f32 0.0, %v837
        %839 = vmatmul.bf16.gmra.mxu0 %v768
        %v840 = vpop.f32.mrf.mxu0
        %v841 = vadd.f32 0.0, %v840
        %v842 = vpop.f32.mrf.mxu0
        %v843 = vadd.f32 0.0, %v842
        %844 = vmatmul.bf16.gmra.mxu0 %v771
        %v845 = vpop.f32.mrf.mxu0
        %v846 = vadd.f32 0.0, %v845
        %v847 = vpop.f32.mrf.mxu0
        %v848 = vadd.f32 0.0, %v847
        %849 = vmatmul.bf16.gmra.mxu0 %v774
        %v850 = vpop.f32.mrf.mxu0
        %v851 = vadd.f32 0.0, %v850
        %v852 = vpop.f32.mrf.mxu0
        %v853 = vadd.f32 0.0, %v852
        %854 = vmatmul.bf16.gmra.mxu0 %v777
        %v855 = vpop.f32.mrf.mxu0
        %v856 = vadd.f32 0.0, %v855
        %v857 = vpop.f32.mrf.mxu0
        %v858 = vadd.f32 0.0, %v857
        %859 = vmatmul.bf16.gmra.mxu0 %v780
        %v860 = vpop.f32.mrf.mxu0
        %v861 = vadd.f32 0.0, %v860
        %v862 = vpop.f32.mrf.mxu0
        %v863 = vadd.f32 0.0, %v862
        %864 = vmatmul.bf16.gmra.mxu0 %v783
        %v865 = vpop.f32.mrf.mxu0
        %v866 = vadd.f32 0.0, %v865
        %v867 = vpop.f32.mrf.mxu0
        %v868 = vadd.f32 0.0, %v867
        %869 = vmatmul.bf16.gmra.mxu0 %v786
        %v870 = vpop.f32.mrf.mxu0
        %v871 = vadd.f32 0.0, %v870
        %v872 = vpop.f32.mrf.mxu0
        %v873 = vadd.f32 0.0, %v872
        %874 = vmatmul.bf16.gmra.mxu0 %v789
        %v875 = vpop.f32.mrf.mxu0
        %v876 = vadd.f32 0.0, %v875
        %v877 = vpop.f32.mrf.mxu0
        %v878 = vadd.f32 0.0, %v877
        %879 = vdwg.mxu0
        %880 = vmatpush.bf16.msra.mxu0 0
        %881 = vmatpush.bf16.msra.mxu0 0
        %882 = vmatpush.bf16.msra.mxu0 0
        %883 = vmatpush.bf16.msra.mxu0 0
        %884 = vmatpush.bf16.msra.mxu0 0
        %885 = vmatpush.bf16.msra.mxu0 0
        %886 = vmatpush.bf16.msra.mxu0 %v738
        %887 = vmatpush.bf16.msra.mxu0 %v736
        %888 = vmatmul.bf16.gmra.mxu0 %v744
        %v889 = vpop.f32.mrf.mxu0
        %v890 = vadd.f32 0.0, %v889
        %v891 = vpop.f32.mrf.mxu0
        %v892 = vadd.f32 0.0, %v891
        %893 = vmatmul.bf16.gmra.mxu0 %v747
        %v894 = vpop.f32.mrf.mxu0
        %v895 = vadd.f32 0.0, %v894
        %v896 = vpop.f32.mrf.mxu0
        %v897 = vadd.f32 0.0, %v896
        %898 = vmatmul.bf16.gmra.mxu0 %v750
        %v899 = vpop.f32.mrf.mxu0
        %v900 = vadd.f32 0.0, %v899
        %v901 = vpop.f32.mrf.mxu0
        %v902 = vadd.f32 0.0, %v901
        %903 = vmatmul.bf16.gmra.mxu0 %v753
        %v904 = vpop.f32.mrf.mxu0
        %v905 = vadd.f32 0.0, %v904
        %v906 = vpop.f32.mrf.mxu0
        %v907 = vadd.f32 0.0, %v906
        %908 = vmatmul.bf16.gmra.mxu0 %v756
        %v909 = vpop.f32.mrf.mxu0
        %v910 = vadd.f32 0.0, %v909
        %v911 = vpop.f32.mrf.mxu0
        %v912 = vadd.f32 0.0, %v911
        %913 = vmatmul.bf16.gmra.mxu0 %v759
        %v914 = vpop.f32.mrf.mxu0
        %v915 = vadd.f32 0.0, %v914
        %v916 = vpop.f32.mrf.mxu0
        %v917 = vadd.f32 0.0, %v916
        %918 = vmatmul.bf16.gmra.mxu0 %v762
        %v919 = vpop.f32.mrf.mxu0
        %v920 = vadd.f32 0.0, %v919
        %v921 = vpop.f32.mrf.mxu0
        %v922 = vadd.f32 0.0, %v921
        %923 = vmatmul.bf16.gmra.mxu0 %v765
        %v924 = vpop.f32.mrf.mxu0
        %v925 = vadd.f32 0.0, %v924
        %v926 = vpop.f32.mrf.mxu0
        %v927 = vadd.f32 0.0, %v926
        %928 = vmatmul.bf16.gmra.mxu0 %v768
        %v929 = vpop.f32.mrf.mxu0
        %v930 = vadd.f32 0.0, %v929
        %v931 = vpop.f32.mrf.mxu0
        %v932 = vadd.f32 0.0, %v931
        %933 = vmatmul.bf16.gmra.mxu0 %v771
        %v934 = vpop.f32.mrf.mxu0
        %v935 = vadd.f32 0.0, %v934
        %v936 = vpop.f32.mrf.mxu0
        %v937 = vadd.f32 0.0, %v936
        %938 = vmatmul.bf16.gmra.mxu0 %v774
        %v939 = vpop.f32.mrf.mxu0
        %v940 = vadd.f32 0.0, %v939
        %v941 = vpop.f32.mrf.mxu0
        %v942 = vadd.f32 0.0, %v941
        %943 = vmatmul.bf16.gmra.mxu0 %v777
        %v944 = vpop.f32.mrf.mxu0
        %v945 = vadd.f32 0.0, %v944
        %v946 = vpop.f32.mrf.mxu0
        %v947 = vadd.f32 0.0, %v946
        %948 = vmatmul.bf16.gmra.mxu0 %v780
        %v949 = vpop.f32.mrf.mxu0
        %v950 = vadd.f32 0.0, %v949
        %v951 = vpop.f32.mrf.mxu0
        %v952 = vadd.f32 0.0, %v951
        %953 = vmatmul.bf16.gmra.mxu0 %v783
        %v954 = vpop.f32.mrf.mxu0
        %v955 = vadd.f32 0.0, %v954
        %v956 = vpop.f32.mrf.mxu0
        %v957 = vadd.f32 0.0, %v956
        %958 = vmatmul.bf16.gmra.mxu0 %v786
        %v959 = vpop.f32.mrf.mxu0
        %v960 = vadd.f32 0.0, %v959
        %v961 = vpop.f32.mrf.mxu0
        %v962 = vadd.f32 0.0, %v961
        %963 = vmatmul.bf16.gmra.mxu0 %v789
        %v964 = vpop.f32.mrf.mxu0
        %v965 = vadd.f32 0.0, %v964
        %v966 = vpop.f32.mrf.mxu0
        %v967 = vadd.f32 0.0, %v966
        %968 = vdwg.mxu0
        %v969 = vld [vmem:[#allocation2] sm:$0x3]
        %v970 = vmax.f32 %v801, %v806
        %v971 = vmax.f32 %v803, %v808
        %v972 = vmax.f32 %v970, %v811
        %v973 = vmax.f32 %v971, %v813
        %v974 = vmax.f32 %v972, %v816
        %v975 = vmax.f32 %v973, %v818
        %v976 = vmax.f32 %v974, %v821
        %v977 = vmax.f32 %v975, %v823
        %v978 = vmax.f32 %v976, %v826
        %v979 = vmax.f32 %v977, %v828
        %v980 = vmax.f32 %v978, %v831
        %v981 = vmax.f32 %v979, %v833
        %v982 = vmax.f32 %v980, %v836
        %v983 = vmax.f32 %v981, %v838
        %v984 = vmax.f32 %v982, %v841
        %v985 = vmax.f32 %v983, %v843
        %v986 = vmax.f32 %v984, %v846
        %v987 = vmax.f32 %v985, %v848
        %v988 = vmax.f32 %v986, %v851
        %v989 = vmax.f32 %v987, %v853
        %v990 = vmax.f32 %v988, %v856
        %v991 = vmax.f32 %v989, %v858
        %v992 = vmax.f32 %v990, %v861
        %v993 = vmax.f32 %v991, %v863
        %v994 = vmax.f32 %v992, %v866
        %v995 = vmax.f32 %v993, %v868
        %v996 = vmax.f32 %v994, %v871
        %v997 = vmax.f32 %v995, %v873
        %v998 = vmax.f32 %v996, %v876
        %v999 = vmax.f32 %v997, %v878
        %v1000 = vmax.f32 %v998, %v999
        %v1001 = vrot.slane %v1000, 4
        %v1002 = vmax.f32 %v1000, %v1001
        %v1003 = vrot.slane %v1002, 2
        %v1004 = vmax.f32 %v1002, %v1003
        %v1005 = vrot.slane %v1004, 1
        %v1006 = vmax.f32 %v1004, %v1005
        %v1007 = vmax.f32 %v890, %v895
        %v1008 = vmax.f32 %v892, %v897
        %v1009 = vmax.f32 %v1007, %v900
        %v1010 = vmax.f32 %v1008, %v902
        %v1011 = vmax.f32 %v1009, %v905
        %v1012 = vmax.f32 %v1010, %v907
        %v1013 = vmax.f32 %v1011, %v910
        %v1014 = vmax.f32 %v1012, %v912
        %v1015 = vmax.f32 %v1013, %v915
        %v1016 = vmax.f32 %v1014, %v917
        %v1017 = vmax.f32 %v1015, %v920
        %v1018 = vmax.f32 %v1016, %v922
        %v1019 = vmax.f32 %v1017, %v925
        %v1020 = vmax.f32 %v1018, %v927
        %v1021 = vmax.f32 %v1019, %v930
        %v1022 = vmax.f32 %v1020, %v932
        %v1023 = vmax.f32 %v1021, %v935
        %v1024 = vmax.f32 %v1022, %v937
        %v1025 = vmax.f32 %v1023, %v940
        %v1026 = vmax.f32 %v1024, %v942
        %v1027 = vmax.f32 %v1025, %v945
        %v1028 = vmax.f32 %v1026, %v947
        %v1029 = vmax.f32 %v1027, %v950
        %v1030 = vmax.f32 %v1028, %v952
        %v1031 = vmax.f32 %v1029, %v955
        %v1032 = vmax.f32 %v1030, %v957
        %v1033 = vmax.f32 %v1031, %v960
        %v1034 = vmax.f32 %v1032, %v962
        %v1035 = vmax.f32 %v1033, %v965
        %v1036 = vmax.f32 %v1034, %v967
        %v1037 = vmax.f32 %v1035, %v1036
        %v1038 = vrot.slane %v1037, 4
        %v1039 = vmax.f32 %v1037, %v1038
        %v1040 = vrot.slane %v1039, 2
        %v1041 = vmax.f32 %v1039, %v1040
        %v1042 = vrot.slane %v1041, 1
        %v1043 = vmax.f32 %v1041, %v1042
        %v1046 = vrot.slane %v1043, 7
        %vm1047 = vcmask 1040384
        %v1048 = vsel %vm1047, %v1006, %v1046
        %v1050 = vmax.f32 %v969, %v1048
        %v1051 = vlaneseq
        %vm1052 = vcmp.ge.s32.totalorder %v1051, 0
        %vm1053 = vcmp.lt.s32.totalorder %v1051, 256
        %vm1054 = vmand %vm1052, %vm1053
        %1055 = vst.msk [vmem:[#allocation2] sm:$0x3] %vm1054, %v1050
        %v1056 = vld [vmem:[%s3 + $0x8] sm:$0xff]
        %v1057 = vld [vmem:[%s3 + $0x30] sm:$0xff]
        %v1058 = vld [vmem:[%s3 + $0x58] sm:$0xff]
        %v1059 = vld [vmem:[%s3 + $0x80] sm:$0xff]
        %v1064 = vunpack.c.l.b16 %v1056
        %v1065 = vunpack.c.h.b16 %v1056
        %v1066 = vunpack.c.l.b16 %v1057
        %v1067 = vunpack.c.h.b16 %v1057
        %v1068 = vunpack.c.l.b16 %v1058
        %v1069 = vunpack.c.h.b16 %v1058
        %v1070 = vunpack.c.l.b16 %v1059
        %v1071 = vunpack.c.h.b16 %v1059
        %v1072 = vpack.c.b16 %v1066, %v1064
        %v1073 = vpack.c.b16 %v1067, %v1065
        %v1074 = vpack.c.b16 %v1070, %v1068
        %v1075 = vpack.c.b16 %v1071, %v1069
        %1080 = vmatpush.bf16.msra.mxu0 0
        %1081 = vmatpush.bf16.msra.mxu0 0
        %1082 = vmatpush.bf16.msra.mxu0 0
        %1083 = vmatpush.bf16.msra.mxu0 0
        %1084 = vmatpush.bf16.msra.mxu0 0
        %1085 = vmatpush.bf16.msra.mxu0 0
        %1086 = vmatpush.bf16.msra.mxu0 %v1074
        %1087 = vmatpush.bf16.msra.mxu0 %v1072
        %1088 = vmatmul.bf16.gmra.mxu0 %v744
        %v1089 = vpop.f32.mrf.mxu0
        %v1090 = vadd.f32 0.0, %v1089
        %v1091 = vpop.f32.mrf.mxu0
        %v1092 = vadd.f32 0.0, %v1091
        %1093 = vmatmul.bf16.gmra.mxu0 %v747
        %v1094 = vpop.f32.mrf.mxu0
        %v1095 = vadd.f32 0.0, %v1094
        %v1096 = vpop.f32.mrf.mxu0
        %v1097 = vadd.f32 0.0, %v1096
        %1098 = vmatmul.bf16.gmra.mxu0 %v750
        %v1099 = vpop.f32.mrf.mxu0
        %v1100 = vadd.f32 0.0, %v1099
        %v1101 = vpop.f32.mrf.mxu0
        %v1102 = vadd.f32 0.0, %v1101
        %1103 = vmatmul.bf16.gmra.mxu0 %v753
        %v1104 = vpop.f32.mrf.mxu0
        %v1105 = vadd.f32 0.0, %v1104
        %v1106 = vpop.f32.mrf.mxu0
        %v1107 = vadd.f32 0.0, %v1106
        %1108 = vmatmul.bf16.gmra.mxu0 %v756
        %v1109 = vpop.f32.mrf.mxu0
        %v1110 = vadd.f32 0.0, %v1109
        %v1111 = vpop.f32.mrf.mxu0
        %v1112 = vadd.f32 0.0, %v1111
        %1113 = vmatmul.bf16.gmra.mxu0 %v759
        %v1114 = vpop.f32.mrf.mxu0
        %v1115 = vadd.f32 0.0, %v1114
        %v1116 = vpop.f32.mrf.mxu0
        %v1117 = vadd.f32 0.0, %v1116
        %1118 = vmatmul.bf16.gmra.mxu0 %v762
        %v1119 = vpop.f32.mrf.mxu0
        %v1120 = vadd.f32 0.0, %v1119
        %v1121 = vpop.f32.mrf.mxu0
        %v1122 = vadd.f32 0.0, %v1121
        %1123 = vmatmul.bf16.gmra.mxu0 %v765
        %v1124 = vpop.f32.mrf.mxu0
        %v1125 = vadd.f32 0.0, %v1124
        %v1126 = vpop.f32.mrf.mxu0
        %v1127 = vadd.f32 0.0, %v1126
        %1128 = vmatmul.bf16.gmra.mxu0 %v768
        %v1129 = vpop.f32.mrf.mxu0
        %v1130 = vadd.f32 0.0, %v1129
        %v1131 = vpop.f32.mrf.mxu0
        %v1132 = vadd.f32 0.0, %v1131
        %1133 = vmatmul.bf16.gmra.mxu0 %v771
        %v1134 = vpop.f32.mrf.mxu0
        %v1135 = vadd.f32 0.0, %v1134
        %v1136 = vpop.f32.mrf.mxu0
        %v1137 = vadd.f32 0.0, %v1136
        %1138 = vmatmul.bf16.gmra.mxu0 %v774
        %v1139 = vpop.f32.mrf.mxu0
        %v1140 = vadd.f32 0.0, %v1139
        %v1141 = vpop.f32.mrf.mxu0
        %v1142 = vadd.f32 0.0, %v1141
        %1143 = vmatmul.bf16.gmra.mxu0 %v777
        %v1144 = vpop.f32.mrf.mxu0
        %v1145 = vadd.f32 0.0, %v1144
        %v1146 = vpop.f32.mrf.mxu0
        %v1147 = vadd.f32 0.0, %v1146
        %1148 = vmatmul.bf16.gmra.mxu0 %v780
        %v1149 = vpop.f32.mrf.mxu0
        %v1150 = vadd.f32 0.0, %v1149
        %v1151 = vpop.f32.mrf.mxu0
        %v1152 = vadd.f32 0.0, %v1151
        %1153 = vmatmul.bf16.gmra.mxu0 %v783
        %v1154 = vpop.f32.mrf.mxu0
        %v1155 = vadd.f32 0.0, %v1154
        %v1156 = vpop.f32.mrf.mxu0
        %v1157 = vadd.f32 0.0, %v1156
        %1158 = vmatmul.bf16.gmra.mxu0 %v786
        %v1159 = vpop.f32.mrf.mxu0
        %v1160 = vadd.f32 0.0, %v1159
        %v1161 = vpop.f32.mrf.mxu0
        %v1162 = vadd.f32 0.0, %v1161
        %1163 = vmatmul.bf16.gmra.mxu0 %v789
        %v1164 = vpop.f32.mrf.mxu0
        %v1165 = vadd.f32 0.0, %v1164
        %v1166 = vpop.f32.mrf.mxu0
        %v1167 = vadd.f32 0.0, %v1166
        %1168 = vdwg.mxu0
        %1169 = vmatpush.bf16.msra.mxu0 0
        %1170 = vmatpush.bf16.msra.mxu0 0
        %1171 = vmatpush.bf16.msra.mxu0 0
        %1172 = vmatpush.bf16.msra.mxu0 0
        %1173 = vmatpush.bf16.msra.mxu0 0
        %1174 = vmatpush.bf16.msra.mxu0 0
        %1175 = vmatpush.bf16.msra.mxu0 %v1075
        %1176 = vmatpush.bf16.msra.mxu0 %v1073
        %1177 = vmatmul.bf16.gmra.mxu0 %v744
        %v1178 = vpop.f32.mrf.mxu0
        %v1179 = vadd.f32 0.0, %v1178
        %v1180 = vpop.f32.mrf.mxu0
        %v1181 = vadd.f32 0.0, %v1180
        %1182 = vmatmul.bf16.gmra.mxu0 %v747
        %v1183 = vpop.f32.mrf.mxu0
        %v1184 = vadd.f32 0.0, %v1183
        %v1185 = vpop.f32.mrf.mxu0
        %v1186 = vadd.f32 0.0, %v1185
        %1187 = vmatmul.bf16.gmra.mxu0 %v750
        %v1188 = vpop.f32.mrf.mxu0
        %v1189 = vadd.f32 0.0, %v1188
        %v1190 = vpop.f32.mrf.mxu0
        %v1191 = vadd.f32 0.0, %v1190
        %1192 = vmatmul.bf16.gmra.mxu0 %v753
        %v1193 = vpop.f32.mrf.mxu0
        %v1194 = vadd.f32 0.0, %v1193
        %v1195 = vpop.f32.mrf.mxu0
        %v1196 = vadd.f32 0.0, %v1195
        %1197 = vmatmul.bf16.gmra.mxu0 %v756
        %v1198 = vpop.f32.mrf.mxu0
        %v1199 = vadd.f32 0.0, %v1198
        %v1200 = vpop.f32.mrf.mxu0
        %v1201 = vadd.f32 0.0, %v1200
        %1202 = vmatmul.bf16.gmra.mxu0 %v759
        %v1203 = vpop.f32.mrf.mxu0
        %v1204 = vadd.f32 0.0, %v1203
        %v1205 = vpop.f32.mrf.mxu0
        %v1206 = vadd.f32 0.0, %v1205
        %1207 = vmatmul.bf16.gmra.mxu0 %v762
        %v1208 = vpop.f32.mrf.mxu0
        %v1209 = vadd.f32 0.0, %v1208
        %v1210 = vpop.f32.mrf.mxu0
        %v1211 = vadd.f32 0.0, %v1210
        %1212 = vmatmul.bf16.gmra.mxu0 %v765
        %v1213 = vpop.f32.mrf.mxu0
        %v1214 = vadd.f32 0.0, %v1213
        %v1215 = vpop.f32.mrf.mxu0
        %v1216 = vadd.f32 0.0, %v1215
        %1217 = vmatmul.bf16.gmra.mxu0 %v768
        %v1218 = vpop.f32.mrf.mxu0
        %v1219 = vadd.f32 0.0, %v1218
        %v1220 = vpop.f32.mrf.mxu0
        %v1221 = vadd.f32 0.0, %v1220
        %1222 = vmatmul.bf16.gmra.mxu0 %v771
        %v1223 = vpop.f32.mrf.mxu0
        %v1224 = vadd.f32 0.0, %v1223
        %v1225 = vpop.f32.mrf.mxu0
        %v1226 = vadd.f32 0.0, %v1225
        %1227 = vmatmul.bf16.gmra.mxu0 %v774
        %v1228 = vpop.f32.mrf.mxu0
        %v1229 = vadd.f32 0.0, %v1228
        %v1230 = vpop.f32.mrf.mxu0
        %v1231 = vadd.f32 0.0, %v1230
        %1232 = vmatmul.bf16.gmra.mxu0 %v777
        %v1233 = vpop.f32.mrf.mxu0
        %v1234 = vadd.f32 0.0, %v1233
        %v1235 = vpop.f32.mrf.mxu0
        %v1236 = vadd.f32 0.0, %v1235
        %1237 = vmatmul.bf16.gmra.mxu0 %v780
        %v1238 = vpop.f32.mrf.mxu0
        %v1239 = vadd.f32 0.0, %v1238
        %v1240 = vpop.f32.mrf.mxu0
        %v1241 = vadd.f32 0.0, %v1240
        %1242 = vmatmul.bf16.gmra.mxu0 %v783
        %v1243 = vpop.f32.mrf.mxu0
        %v1244 = vadd.f32 0.0, %v1243
        %v1245 = vpop.f32.mrf.mxu0
        %v1246 = vadd.f32 0.0, %v1245
        %1247 = vmatmul.bf16.gmra.mxu0 %v786
        %v1248 = vpop.f32.mrf.mxu0
        %v1249 = vadd.f32 0.0, %v1248
        %v1250 = vpop.f32.mrf.mxu0
        %v1251 = vadd.f32 0.0, %v1250
        %1252 = vmatmul.bf16.gmra.mxu0 %v789
        %v1253 = vpop.f32.mrf.mxu0
        %v1254 = vadd.f32 0.0, %v1253
        %v1255 = vpop.f32.mrf.mxu0
        %v1256 = vadd.f32 0.0, %v1255
        %1257 = vdwg.mxu0
        %v1258 = vld [vmem:[#allocation2 + $0x2] sm:$0x3]
        %v1259 = vmax.f32 %v1090, %v1095
        %v1260 = vmax.f32 %v1092, %v1097
        %v1261 = vmax.f32 %v1259, %v1100
        %v1262 = vmax.f32 %v1260, %v1102
        %v1263 = vmax.f32 %v1261, %v1105
        %v1264 = vmax.f32 %v1262, %v1107
        %v1265 = vmax.f32 %v1263, %v1110
        %v1266 = vmax.f32 %v1264, %v1112
        %v1267 = vmax.f32 %v1265, %v1115
        %v1268 = vmax.f32 %v1266, %v1117
        %v1269 = vmax.f32 %v1267, %v1120
        %v1270 = vmax.f32 %v1268, %v1122
        %v1271 = vmax.f32 %v1269, %v1125
        %v1272 = vmax.f32 %v1270, %v1127
        %v1273 = vmax.f32 %v1271, %v1130
        %v1274 = vmax.f32 %v1272, %v1132
        %v1275 = vmax.f32 %v1273, %v1135
        %v1276 = vmax.f32 %v1274, %v1137
        %v1277 = vmax.f32 %v1275, %v1140
        %v1278 = vmax.f32 %v1276, %v1142
        %v1279 = vmax.f32 %v1277, %v1145
        %v1280 = vmax.f32 %v1278, %v1147
        %v1281 = vmax.f32 %v1279, %v1150
        %v1282 = vmax.f32 %v1280, %v1152
        %v1283 = vmax.f32 %v1281, %v1155
        %v1284 = vmax.f32 %v1282, %v1157
        %v1285 = vmax.f32 %v1283, %v1160
        %v1286 = vmax.f32 %v1284, %v1162
        %v1287 = vmax.f32 %v1285, %v1165
        %v1288 = vmax.f32 %v1286, %v1167
        %v1289 = vmax.f32 %v1287, %v1288
        %v1290 = vrot.slane %v1289, 4
        %v1291 = vmax.f32 %v1289, %v1290
        %v1292 = vrot.slane %v1291, 2
        %v1293 = vmax.f32 %v1291, %v1292
        %v1294 = vrot.slane %v1293, 1
        %v1295 = vmax.f32 %v1293, %v1294
        %v1296 = vmax.f32 %v1179, %v1184
        %v1297 = vmax.f32 %v1181, %v1186
        %v1298 = vmax.f32 %v1296, %v1189
        %v1299 = vmax.f32 %v1297, %v1191
        %v1300 = vmax.f32 %v1298, %v1194
        %v1301 = vmax.f32 %v1299, %v1196
        %v1302 = vmax.f32 %v1300, %v1199
        %v1303 = vmax.f32 %v1301, %v1201
        %v1304 = vmax.f32 %v1302, %v1204
        %v1305 = vmax.f32 %v1303, %v1206
        %v1306 = vmax.f32 %v1304, %v1209
        %v1307 = vmax.f32 %v1305, %v1211
        %v1308 = vmax.f32 %v1306, %v1214
        %v1309 = vmax.f32 %v1307, %v1216
        %v1310 = vmax.f32 %v1308, %v1219
        %v1311 = vmax.f32 %v1309, %v1221
        %v1312 = vmax.f32 %v1310, %v1224
        %v1313 = vmax.f32 %v1311, %v1226
        %v1314 = vmax.f32 %v1312, %v1229
        %v1315 = vmax.f32 %v1313, %v1231
        %v1316 = vmax.f32 %v1314, %v1234
        %v1317 = vmax.f32 %v1315, %v1236
        %v1318 = vmax.f32 %v1316, %v1239
        %v1319 = vmax.f32 %v1317, %v1241
        %v1320 = vmax.f32 %v1318, %v1244
        %v1321 = vmax.f32 %v1319, %v1246
        %v1322 = vmax.f32 %v1320, %v1249
        %v1323 = vmax.f32 %v1321, %v1251
        %v1324 = vmax.f32 %v1322, %v1254
        %v1325 = vmax.f32 %v1323, %v1256
        %v1326 = vmax.f32 %v1324, %v1325
        %v1327 = vrot.slane %v1326, 4
        %v1328 = vmax.f32 %v1326, %v1327
        %v1329 = vrot.slane %v1328, 2
        %v1330 = vmax.f32 %v1328, %v1329
        %v1331 = vrot.slane %v1330, 1
        %v1332 = vmax.f32 %v1330, %v1331
        %v1335 = vrot.slane %v1332, 7
        %v1336 = vsel %vm1047, %v1295, %v1335
        %v1338 = vmax.f32 %v1258, %v1336
        %1339 = vst.msk [vmem:[#allocation2 + $0x2] sm:$0x3] %vm1054, %v1338
        %v1340 = vld [vmem:[%s3 + $0x10] sm:$0xff]
        %v1341 = vld [vmem:[%s3 + $0x38] sm:$0xff]
        %v1342 = vld [vmem:[%s3 + $0x60] sm:$0xff]
        %v1343 = vld [vmem:[%s3 + $0x88] sm:$0xff]
        %v1348 = vunpack.c.l.b16 %v1340
        %v1349 = vunpack.c.h.b16 %v1340
        %v1350 = vunpack.c.l.b16 %v1341
        %v1351 = vunpack.c.h.b16 %v1341
        %v1352 = vunpack.c.l.b16 %v1342
        %v1353 = vunpack.c.h.b16 %v1342
        %v1354 = vunpack.c.l.b16 %v1343
        %v1355 = vunpack.c.h.b16 %v1343
        %v1356 = vpack.c.b16 %v1350, %v1348
        %v1357 = vpack.c.b16 %v1351, %v1349
        %v1358 = vpack.c.b16 %v1354, %v1352
        %v1359 = vpack.c.b16 %v1355, %v1353
        %1364 = vmatpush.bf16.msra.mxu0 0
        %1365 = vmatpush.bf16.msra.mxu0 0
        %1366 = vmatpush.bf16.msra.mxu0 0
        %1367 = vmatpush.bf16.msra.mxu0 0
        %1368 = vmatpush.bf16.msra.mxu0 0
        %1369 = vmatpush.bf16.msra.mxu0 0
        %1370 = vmatpush.bf16.msra.mxu0 %v1358
        %1371 = vmatpush.bf16.msra.mxu0 %v1356
        %1372 = vmatmul.bf16.gmra.mxu0 %v744
        %v1373 = vpop.f32.mrf.mxu0
        %v1374 = vadd.f32 0.0, %v1373
        %v1375 = vpop.f32.mrf.mxu0
        %v1376 = vadd.f32 0.0, %v1375
        %1377 = vmatmul.bf16.gmra.mxu0 %v747
        %v1378 = vpop.f32.mrf.mxu0
        %v1379 = vadd.f32 0.0, %v1378
        %v1380 = vpop.f32.mrf.mxu0
        %v1381 = vadd.f32 0.0, %v1380
        %1382 = vmatmul.bf16.gmra.mxu0 %v750
        %v1383 = vpop.f32.mrf.mxu0
        %v1384 = vadd.f32 0.0, %v1383
        %v1385 = vpop.f32.mrf.mxu0
        %v1386 = vadd.f32 0.0, %v1385
        %1387 = vmatmul.bf16.gmra.mxu0 %v753
        %v1388 = vpop.f32.mrf.mxu0
        %v1389 = vadd.f32 0.0, %v1388
        %v1390 = vpop.f32.mrf.mxu0
        %v1391 = vadd.f32 0.0, %v1390
        %1392 = vmatmul.bf16.gmra.mxu0 %v756
        %v1393 = vpop.f32.mrf.mxu0
        %v1394 = vadd.f32 0.0, %v1393
        %v1395 = vpop.f32.mrf.mxu0
        %v1396 = vadd.f32 0.0, %v1395
        %1397 = vmatmul.bf16.gmra.mxu0 %v759
        %v1398 = vpop.f32.mrf.mxu0
        %v1399 = vadd.f32 0.0, %v1398
        %v1400 = vpop.f32.mrf.mxu0
        %v1401 = vadd.f32 0.0, %v1400
        %1402 = vmatmul.bf16.gmra.mxu0 %v762
        %v1403 = vpop.f32.mrf.mxu0
        %v1404 = vadd.f32 0.0, %v1403
        %v1405 = vpop.f32.mrf.mxu0
        %v1406 = vadd.f32 0.0, %v1405
        %1407 = vmatmul.bf16.gmra.mxu0 %v765
        %v1408 = vpop.f32.mrf.mxu0
        %v1409 = vadd.f32 0.0, %v1408
        %v1410 = vpop.f32.mrf.mxu0
        %v1411 = vadd.f32 0.0, %v1410
        %1412 = vmatmul.bf16.gmra.mxu0 %v768
        %v1413 = vpop.f32.mrf.mxu0
        %v1414 = vadd.f32 0.0, %v1413
        %v1415 = vpop.f32.mrf.mxu0
        %v1416 = vadd.f32 0.0, %v1415
        %1417 = vmatmul.bf16.gmra.mxu0 %v771
        %v1418 = vpop.f32.mrf.mxu0
        %v1419 = vadd.f32 0.0, %v1418
        %v1420 = vpop.f32.mrf.mxu0
        %v1421 = vadd.f32 0.0, %v1420
        %1422 = vmatmul.bf16.gmra.mxu0 %v774
        %v1423 = vpop.f32.mrf.mxu0
        %v1424 = vadd.f32 0.0, %v1423
        %v1425 = vpop.f32.mrf.mxu0
        %v1426 = vadd.f32 0.0, %v1425
        %1427 = vmatmul.bf16.gmra.mxu0 %v777
        %v1428 = vpop.f32.mrf.mxu0
        %v1429 = vadd.f32 0.0, %v1428
        %v1430 = vpop.f32.mrf.mxu0
        %v1431 = vadd.f32 0.0, %v1430
        %1432 = vmatmul.bf16.gmra.mxu0 %v780
        %v1433 = vpop.f32.mrf.mxu0
        %v1434 = vadd.f32 0.0, %v1433
        %v1435 = vpop.f32.mrf.mxu0
        %v1436 = vadd.f32 0.0, %v1435
        %1437 = vmatmul.bf16.gmra.mxu0 %v783
        %v1438 = vpop.f32.mrf.mxu0
        %v1439 = vadd.f32 0.0, %v1438
        %v1440 = vpop.f32.mrf.mxu0
        %v1441 = vadd.f32 0.0, %v1440
        %1442 = vmatmul.bf16.gmra.mxu0 %v786
        %v1443 = vpop.f32.mrf.mxu0
        %v1444 = vadd.f32 0.0, %v1443
        %v1445 = vpop.f32.mrf.mxu0
        %v1446 = vadd.f32 0.0, %v1445
        %1447 = vmatmul.bf16.gmra.mxu0 %v789
        %v1448 = vpop.f32.mrf.mxu0
        %v1449 = vadd.f32 0.0, %v1448
        %v1450 = vpop.f32.mrf.mxu0
        %v1451 = vadd.f32 0.0, %v1450
        %1452 = vdwg.mxu0
        %1453 = vmatpush.bf16.msra.mxu0 0
        %1454 = vmatpush.bf16.msra.mxu0 0
        %1455 = vmatpush.bf16.msra.mxu0 0
        %1456 = vmatpush.bf16.msra.mxu0 0
        %1457 = vmatpush.bf16.msra.mxu0 0
        %1458 = vmatpush.bf16.msra.mxu0 0
        %1459 = vmatpush.bf16.msra.mxu0 %v1359
        %1460 = vmatpush.bf16.msra.mxu0 %v1357
        %1461 = vmatmul.bf16.gmra.mxu0 %v744
        %v1462 = vpop.f32.mrf.mxu0
        %v1463 = vadd.f32 0.0, %v1462
        %v1464 = vpop.f32.mrf.mxu0
        %v1465 = vadd.f32 0.0, %v1464
        %1466 = vmatmul.bf16.gmra.mxu0 %v747
        %v1467 = vpop.f32.mrf.mxu0
        %v1468 = vadd.f32 0.0, %v1467
        %v1469 = vpop.f32.mrf.mxu0
        %v1470 = vadd.f32 0.0, %v1469
        %1471 = vmatmul.bf16.gmra.mxu0 %v750
        %v1472 = vpop.f32.mrf.mxu0
        %v1473 = vadd.f32 0.0, %v1472
        %v1474 = vpop.f32.mrf.mxu0
        %v1475 = vadd.f32 0.0, %v1474
        %1476 = vmatmul.bf16.gmra.mxu0 %v753
        %v1477 = vpop.f32.mrf.mxu0
        %v1478 = vadd.f32 0.0, %v1477
        %v1479 = vpop.f32.mrf.mxu0
        %v1480 = vadd.f32 0.0, %v1479
        %1481 = vmatmul.bf16.gmra.mxu0 %v756
        %v1482 = vpop.f32.mrf.mxu0
        %v1483 = vadd.f32 0.0, %v1482
        %v1484 = vpop.f32.mrf.mxu0
        %v1485 = vadd.f32 0.0, %v1484
        %1486 = vmatmul.bf16.gmra.mxu0 %v759
        %v1487 = vpop.f32.mrf.mxu0
        %v1488 = vadd.f32 0.0, %v1487
        %v1489 = vpop.f32.mrf.mxu0
        %v1490 = vadd.f32 0.0, %v1489
        %1491 = vmatmul.bf16.gmra.mxu0 %v762
        %v1492 = vpop.f32.mrf.mxu0
        %v1493 = vadd.f32 0.0, %v1492
        %v1494 = vpop.f32.mrf.mxu0
        %v1495 = vadd.f32 0.0, %v1494
        %1496 = vmatmul.bf16.gmra.mxu0 %v765
        %v1497 = vpop.f32.mrf.mxu0
        %v1498 = vadd.f32 0.0, %v1497
        %v1499 = vpop.f32.mrf.mxu0
        %v1500 = vadd.f32 0.0, %v1499
        %1501 = vmatmul.bf16.gmra.mxu0 %v768
        %v1502 = vpop.f32.mrf.mxu0
        %v1503 = vadd.f32 0.0, %v1502
        %v1504 = vpop.f32.mrf.mxu0
        %v1505 = vadd.f32 0.0, %v1504
        %1506 = vmatmul.bf16.gmra.mxu0 %v771
        %v1507 = vpop.f32.mrf.mxu0
        %v1508 = vadd.f32 0.0, %v1507
        %v1509 = vpop.f32.mrf.mxu0
        %v1510 = vadd.f32 0.0, %v1509
        %1511 = vmatmul.bf16.gmra.mxu0 %v774
        %v1512 = vpop.f32.mrf.mxu0
        %v1513 = vadd.f32 0.0, %v1512
        %v1514 = vpop.f32.mrf.mxu0
        %v1515 = vadd.f32 0.0, %v1514
        %1516 = vmatmul.bf16.gmra.mxu0 %v777
        %v1517 = vpop.f32.mrf.mxu0
        %v1518 = vadd.f32 0.0, %v1517
        %v1519 = vpop.f32.mrf.mxu0
        %v1520 = vadd.f32 0.0, %v1519
        %1521 = vmatmul.bf16.gmra.mxu0 %v780
        %v1522 = vpop.f32.mrf.mxu0
        %v1523 = vadd.f32 0.0, %v1522
        %v1524 = vpop.f32.mrf.mxu0
        %v1525 = vadd.f32 0.0, %v1524
        %1526 = vmatmul.bf16.gmra.mxu0 %v783
        %v1527 = vpop.f32.mrf.mxu0
        %v1528 = vadd.f32 0.0, %v1527
        %v1529 = vpop.f32.mrf.mxu0
        %v1530 = vadd.f32 0.0, %v1529
        %1531 = vmatmul.bf16.gmra.mxu0 %v786
        %v1532 = vpop.f32.mrf.mxu0
        %v1533 = vadd.f32 0.0, %v1532
        %v1534 = vpop.f32.mrf.mxu0
        %v1535 = vadd.f32 0.0, %v1534
        %1536 = vmatmul.bf16.gmra.mxu0 %v789
        %v1537 = vpop.f32.mrf.mxu0
        %v1538 = vadd.f32 0.0, %v1537
        %v1539 = vpop.f32.mrf.mxu0
        %v1540 = vadd.f32 0.0, %v1539
        %1541 = vdwg.mxu0
        %v1542 = vld [vmem:[#allocation2 + $0x4] sm:$0x3]
        %v1543 = vmax.f32 %v1374, %v1379
        %v1544 = vmax.f32 %v1376, %v1381
        %v1545 = vmax.f32 %v1543, %v1384
        %v1546 = vmax.f32 %v1544, %v1386
        %v1547 = vmax.f32 %v1545, %v1389
        %v1548 = vmax.f32 %v1546, %v1391
        %v1549 = vmax.f32 %v1547, %v1394
        %v1550 = vmax.f32 %v1548, %v1396
        %v1551 = vmax.f32 %v1549, %v1399
        %v1552 = vmax.f32 %v1550, %v1401
        %v1553 = vmax.f32 %v1551, %v1404
        %v1554 = vmax.f32 %v1552, %v1406
        %v1555 = vmax.f32 %v1553, %v1409
        %v1556 = vmax.f32 %v1554, %v1411
        %v1557 = vmax.f32 %v1555, %v1414
        %v1558 = vmax.f32 %v1556, %v1416
        %v1559 = vmax.f32 %v1557, %v1419
        %v1560 = vmax.f32 %v1558, %v1421
        %v1561 = vmax.f32 %v1559, %v1424
        %v1562 = vmax.f32 %v1560, %v1426
        %v1563 = vmax.f32 %v1561, %v1429
        %v1564 = vmax.f32 %v1562, %v1431
        %v1565 = vmax.f32 %v1563, %v1434
        %v1566 = vmax.f32 %v1564, %v1436
        %v1567 = vmax.f32 %v1565, %v1439
        %v1568 = vmax.f32 %v1566, %v1441
        %v1569 = vmax.f32 %v1567, %v1444
        %v1570 = vmax.f32 %v1568, %v1446
        %v1571 = vmax.f32 %v1569, %v1449
        %v1572 = vmax.f32 %v1570, %v1451
        %v1573 = vmax.f32 %v1571, %v1572
        %v1574 = vrot.slane %v1573, 4
        %v1575 = vmax.f32 %v1573, %v1574
        %v1576 = vrot.slane %v1575, 2
        %v1577 = vmax.f32 %v1575, %v1576
        %v1578 = vrot.slane %v1577, 1
        %v1579 = vmax.f32 %v1577, %v1578
        %v1580 = vmax.f32 %v1463, %v1468
        %v1581 = vmax.f32 %v1465, %v1470
        %v1582 = vmax.f32 %v1580, %v1473
        %v1583 = vmax.f32 %v1581, %v1475
        %v1584 = vmax.f32 %v1582, %v1478
        %v1585 = vmax.f32 %v1583, %v1480
        %v1586 = vmax.f32 %v1584, %v1483
        %v1587 = vmax.f32 %v1585, %v1485
        %v1588 = vmax.f32 %v1586, %v1488
        %v1589 = vmax.f32 %v1587, %v1490
        %v1590 = vmax.f32 %v1588, %v1493
        %v1591 = vmax.f32 %v1589, %v1495
        %v1592 = vmax.f32 %v1590, %v1498
        %v1593 = vmax.f32 %v1591, %v1500
        %v1594 = vmax.f32 %v1592, %v1503
        %v1595 = vmax.f32 %v1593, %v1505
        %v1596 = vmax.f32 %v1594, %v1508
        %v1597 = vmax.f32 %v1595, %v1510
        %v1598 = vmax.f32 %v1596, %v1513
        %v1599 = vmax.f32 %v1597, %v1515
        %v1600 = vmax.f32 %v1598, %v1518
        %v1601 = vmax.f32 %v1599, %v1520
        %v1602 = vmax.f32 %v1600, %v1523
        %v1603 = vmax.f32 %v1601, %v1525
        %v1604 = vmax.f32 %v1602, %v1528
        %v1605 = vmax.f32 %v1603, %v1530
        %v1606 = vmax.f32 %v1604, %v1533
        %v1607 = vmax.f32 %v1605, %v1535
        %v1608 = vmax.f32 %v1606, %v1538
        %v1609 = vmax.f32 %v1607, %v1540
        %v1610 = vmax.f32 %v1608, %v1609
        %v1611 = vrot.slane %v1610, 4
        %v1612 = vmax.f32 %v1610, %v1611
        %v1613 = vrot.slane %v1612, 2
        %v1614 = vmax.f32 %v1612, %v1613
        %v1615 = vrot.slane %v1614, 1
        %v1616 = vmax.f32 %v1614, %v1615
        %v1619 = vrot.slane %v1616, 7
        %v1620 = vsel %vm1047, %v1579, %v1619
        %v1622 = vmax.f32 %v1542, %v1620
        %1623 = vst.msk [vmem:[#allocation2 + $0x4] sm:$0x3] %vm1054, %v1622
        %v1624 = vld [vmem:[%s3 + $0x18] sm:$0xff]
        %v1625 = vld [vmem:[%s3 + $0x40] sm:$0xff]
        %v1626 = vld [vmem:[%s3 + $0x68] sm:$0xff]
        %v1627 = vld [vmem:[%s3 + $0x90] sm:$0xff]
        %v1632 = vunpack.c.l.b16 %v1624
        %v1633 = vunpack.c.h.b16 %v1624
        %v1634 = vunpack.c.l.b16 %v1625
        %v1635 = vunpack.c.h.b16 %v1625
        %v1636 = vunpack.c.l.b16 %v1626
        %v1637 = vunpack.c.h.b16 %v1626
        %v1638 = vunpack.c.l.b16 %v1627
        %v1639 = vunpack.c.h.b16 %v1627
        %v1640 = vpack.c.b16 %v1634, %v1632
        %v1641 = vpack.c.b16 %v1635, %v1633
        %v1642 = vpack.c.b16 %v1638, %v1636
        %v1643 = vpack.c.b16 %v1639, %v1637
        %1648 = vmatpush.bf16.msra.mxu0 0
        %1649 = vmatpush.bf16.msra.mxu0 0
        %1650 = vmatpush.bf16.msra.mxu0 0
        %1651 = vmatpush.bf16.msra.mxu0 0
        %1652 = vmatpush.bf16.msra.mxu0 0
        %1653 = vmatpush.bf16.msra.mxu0 0
        %1654 = vmatpush.bf16.msra.mxu0 %v1642
        %1655 = vmatpush.bf16.msra.mxu0 %v1640
        %1656 = vmatmul.bf16.gmra.mxu0 %v744
        %v1657 = vpop.f32.mrf.mxu0
        %v1658 = vadd.f32 0.0, %v1657
        %v1659 = vpop.f32.mrf.mxu0
        %v1660 = vadd.f32 0.0, %v1659
        %1661 = vmatmul.bf16.gmra.mxu0 %v747
        %v1662 = vpop.f32.mrf.mxu0
        %v1663 = vadd.f32 0.0, %v1662
        %v1664 = vpop.f32.mrf.mxu0
        %v1665 = vadd.f32 0.0, %v1664
        %1666 = vmatmul.bf16.gmra.mxu0 %v750
        %v1667 = vpop.f32.mrf.mxu0
        %v1668 = vadd.f32 0.0, %v1667
        %v1669 = vpop.f32.mrf.mxu0
        %v1670 = vadd.f32 0.0, %v1669
        %1671 = vmatmul.bf16.gmra.mxu0 %v753
        %v1672 = vpop.f32.mrf.mxu0
        %v1673 = vadd.f32 0.0, %v1672
        %v1674 = vpop.f32.mrf.mxu0
        %v1675 = vadd.f32 0.0, %v1674
        %1676 = vmatmul.bf16.gmra.mxu0 %v756
        %v1677 = vpop.f32.mrf.mxu0
        %v1678 = vadd.f32 0.0, %v1677
        %v1679 = vpop.f32.mrf.mxu0
        %v1680 = vadd.f32 0.0, %v1679
        %1681 = vmatmul.bf16.gmra.mxu0 %v759
        %v1682 = vpop.f32.mrf.mxu0
        %v1683 = vadd.f32 0.0, %v1682
        %v1684 = vpop.f32.mrf.mxu0
        %v1685 = vadd.f32 0.0, %v1684
        %1686 = vmatmul.bf16.gmra.mxu0 %v762
        %v1687 = vpop.f32.mrf.mxu0
        %v1688 = vadd.f32 0.0, %v1687
        %v1689 = vpop.f32.mrf.mxu0
        %v1690 = vadd.f32 0.0, %v1689
        %1691 = vmatmul.bf16.gmra.mxu0 %v765
        %v1692 = vpop.f32.mrf.mxu0
        %v1693 = vadd.f32 0.0, %v1692
        %v1694 = vpop.f32.mrf.mxu0
        %v1695 = vadd.f32 0.0, %v1694
        %1696 = vmatmul.bf16.gmra.mxu0 %v768
        %v1697 = vpop.f32.mrf.mxu0
        %v1698 = vadd.f32 0.0, %v1697
        %v1699 = vpop.f32.mrf.mxu0
        %v1700 = vadd.f32 0.0, %v1699
        %1701 = vmatmul.bf16.gmra.mxu0 %v771
        %v1702 = vpop.f32.mrf.mxu0
        %v1703 = vadd.f32 0.0, %v1702
        %v1704 = vpop.f32.mrf.mxu0
        %v1705 = vadd.f32 0.0, %v1704
        %1706 = vmatmul.bf16.gmra.mxu0 %v774
        %v1707 = vpop.f32.mrf.mxu0
        %v1708 = vadd.f32 0.0, %v1707
        %v1709 = vpop.f32.mrf.mxu0
        %v1710 = vadd.f32 0.0, %v1709
        %1711 = vmatmul.bf16.gmra.mxu0 %v777
        %v1712 = vpop.f32.mrf.mxu0
        %v1713 = vadd.f32 0.0, %v1712
        %v1714 = vpop.f32.mrf.mxu0
        %v1715 = vadd.f32 0.0, %v1714
        %1716 = vmatmul.bf16.gmra.mxu0 %v780
        %v1717 = vpop.f32.mrf.mxu0
        %v1718 = vadd.f32 0.0, %v1717
        %v1719 = vpop.f32.mrf.mxu0
        %v1720 = vadd.f32 0.0, %v1719
        %1721 = vmatmul.bf16.gmra.mxu0 %v783
        %v1722 = vpop.f32.mrf.mxu0
        %v1723 = vadd.f32 0.0, %v1722
        %v1724 = vpop.f32.mrf.mxu0
        %v1725 = vadd.f32 0.0, %v1724
        %1726 = vmatmul.bf16.gmra.mxu0 %v786
        %v1727 = vpop.f32.mrf.mxu0
        %v1728 = vadd.f32 0.0, %v1727
        %v1729 = vpop.f32.mrf.mxu0
        %v1730 = vadd.f32 0.0, %v1729
        %1731 = vmatmul.bf16.gmra.mxu0 %v789
        %v1732 = vpop.f32.mrf.mxu0
        %v1733 = vadd.f32 0.0, %v1732
        %v1734 = vpop.f32.mrf.mxu0
        %v1735 = vadd.f32 0.0, %v1734
        %1736 = vdwg.mxu0
        %1737 = vmatpush.bf16.msra.mxu0 0
        %1738 = vmatpush.bf16.msra.mxu0 0
        %1739 = vmatpush.bf16.msra.mxu0 0
        %1740 = vmatpush.bf16.msra.mxu0 0
        %1741 = vmatpush.bf16.msra.mxu0 0
        %1742 = vmatpush.bf16.msra.mxu0 0
        %1743 = vmatpush.bf16.msra.mxu0 %v1643
        %1744 = vmatpush.bf16.msra.mxu0 %v1641
        %1745 = vmatmul.bf16.gmra.mxu0 %v744
        %v1746 = vpop.f32.mrf.mxu0
        %v1747 = vadd.f32 0.0, %v1746
        %v1748 = vpop.f32.mrf.mxu0
        %v1749 = vadd.f32 0.0, %v1748
        %1750 = vmatmul.bf16.gmra.mxu0 %v747
        %v1751 = vpop.f32.mrf.mxu0
        %v1752 = vadd.f32 0.0, %v1751
        %v1753 = vpop.f32.mrf.mxu0
        %v1754 = vadd.f32 0.0, %v1753
        %1755 = vmatmul.bf16.gmra.mxu0 %v750
        %v1756 = vpop.f32.mrf.mxu0
        %v1757 = vadd.f32 0.0, %v1756
        %v1758 = vpop.f32.mrf.mxu0
        %v1759 = vadd.f32 0.0, %v1758
        %1760 = vmatmul.bf16.gmra.mxu0 %v753
        %v1761 = vpop.f32.mrf.mxu0
        %v1762 = vadd.f32 0.0, %v1761
        %v1763 = vpop.f32.mrf.mxu0
        %v1764 = vadd.f32 0.0, %v1763
        %1765 = vmatmul.bf16.gmra.mxu0 %v756
        %v1766 = vpop.f32.mrf.mxu0
        %v1767 = vadd.f32 0.0, %v1766
        %v1768 = vpop.f32.mrf.mxu0
        %v1769 = vadd.f32 0.0, %v1768
        %1770 = vmatmul.bf16.gmra.mxu0 %v759
        %v1771 = vpop.f32.mrf.mxu0
        %v1772 = vadd.f32 0.0, %v1771
        %v1773 = vpop.f32.mrf.mxu0
        %v1774 = vadd.f32 0.0, %v1773
        %1775 = vmatmul.bf16.gmra.mxu0 %v762
        %v1776 = vpop.f32.mrf.mxu0
        %v1777 = vadd.f32 0.0, %v1776
        %v1778 = vpop.f32.mrf.mxu0
        %v1779 = vadd.f32 0.0, %v1778
        %1780 = vmatmul.bf16.gmra.mxu0 %v765
        %v1781 = vpop.f32.mrf.mxu0
        %v1782 = vadd.f32 0.0, %v1781
        %v1783 = vpop.f32.mrf.mxu0
        %v1784 = vadd.f32 0.0, %v1783
        %1785 = vmatmul.bf16.gmra.mxu0 %v768
        %v1786 = vpop.f32.mrf.mxu0
        %v1787 = vadd.f32 0.0, %v1786
        %v1788 = vpop.f32.mrf.mxu0
        %v1789 = vadd.f32 0.0, %v1788
        %1790 = vmatmul.bf16.gmra.mxu0 %v771
        %v1791 = vpop.f32.mrf.mxu0
        %v1792 = vadd.f32 0.0, %v1791
        %v1793 = vpop.f32.mrf.mxu0
        %v1794 = vadd.f32 0.0, %v1793
        %1795 = vmatmul.bf16.gmra.mxu0 %v774
        %v1796 = vpop.f32.mrf.mxu0
        %v1797 = vadd.f32 0.0, %v1796
        %v1798 = vpop.f32.mrf.mxu0
        %v1799 = vadd.f32 0.0, %v1798
        %1800 = vmatmul.bf16.gmra.mxu0 %v777
        %v1801 = vpop.f32.mrf.mxu0
        %v1802 = vadd.f32 0.0, %v1801
        %v1803 = vpop.f32.mrf.mxu0
        %v1804 = vadd.f32 0.0, %v1803
        %1805 = vmatmul.bf16.gmra.mxu0 %v780
        %v1806 = vpop.f32.mrf.mxu0
        %v1807 = vadd.f32 0.0, %v1806
        %v1808 = vpop.f32.mrf.mxu0
        %v1809 = vadd.f32 0.0, %v1808
        %1810 = vmatmul.bf16.gmra.mxu0 %v783
        %v1811 = vpop.f32.mrf.mxu0
        %v1812 = vadd.f32 0.0, %v1811
        %v1813 = vpop.f32.mrf.mxu0
        %v1814 = vadd.f32 0.0, %v1813
        %1815 = vmatmul.bf16.gmra.mxu0 %v786
        %v1816 = vpop.f32.mrf.mxu0
        %v1817 = vadd.f32 0.0, %v1816
        %v1818 = vpop.f32.mrf.mxu0
        %v1819 = vadd.f32 0.0, %v1818
        %1820 = vmatmul.bf16.gmra.mxu0 %v789
        %v1821 = vpop.f32.mrf.mxu0
        %v1822 = vadd.f32 0.0, %v1821
        %v1823 = vpop.f32.mrf.mxu0
        %v1824 = vadd.f32 0.0, %v1823
        %1825 = vdwg.mxu0
        %v1826 = vld [vmem:[#allocation2 + $0x6] sm:$0x3]
        %v1827 = vmax.f32 %v1658, %v1663
        %v1828 = vmax.f32 %v1660, %v1665
        %v1829 = vmax.f32 %v1827, %v1668
        %v1830 = vmax.f32 %v1828, %v1670
        %v1831 = vmax.f32 %v1829, %v1673
        %v1832 = vmax.f32 %v1830, %v1675
        %v1833 = vmax.f32 %v1831, %v1678
        %v1834 = vmax.f32 %v1832, %v1680
        %v1835 = vmax.f32 %v1833, %v1683
        %v1836 = vmax.f32 %v1834, %v1685
        %v1837 = vmax.f32 %v1835, %v1688
        %v1838 = vmax.f32 %v1836, %v1690
        %v1839 = vmax.f32 %v1837, %v1693
        %v1840 = vmax.f32 %v1838, %v1695
        %v1841 = vmax.f32 %v1839, %v1698
        %v1842 = vmax.f32 %v1840, %v1700
        %v1843 = vmax.f32 %v1841, %v1703
        %v1844 = vmax.f32 %v1842, %v1705
        %v1845 = vmax.f32 %v1843, %v1708
        %v1846 = vmax.f32 %v1844, %v1710
        %v1847 = vmax.f32 %v1845, %v1713
        %v1848 = vmax.f32 %v1846, %v1715
        %v1849 = vmax.f32 %v1847, %v1718
        %v1850 = vmax.f32 %v1848, %v1720
        %v1851 = vmax.f32 %v1849, %v1723
        %v1852 = vmax.f32 %v1850, %v1725
        %v1853 = vmax.f32 %v1851, %v1728
        %v1854 = vmax.f32 %v1852, %v1730
        %v1855 = vmax.f32 %v1853, %v1733
        %v1856 = vmax.f32 %v1854, %v1735
        %v1857 = vmax.f32 %v1855, %v1856
        %v1858 = vrot.slane %v1857, 4
        %v1859 = vmax.f32 %v1857, %v1858
        %v1860 = vrot.slane %v1859, 2
        %v1861 = vmax.f32 %v1859, %v1860
        %v1862 = vrot.slane %v1861, 1
        %v1863 = vmax.f32 %v1861, %v1862
        %v1864 = vmax.f32 %v1747, %v1752
        %v1865 = vmax.f32 %v1749, %v1754
        %v1866 = vmax.f32 %v1864, %v1757
        %v1867 = vmax.f32 %v1865, %v1759
        %v1868 = vmax.f32 %v1866, %v1762
        %v1869 = vmax.f32 %v1867, %v1764
        %v1870 = vmax.f32 %v1868, %v1767
        %v1871 = vmax.f32 %v1869, %v1769
        %v1872 = vmax.f32 %v1870, %v1772
        %v1873 = vmax.f32 %v1871, %v1774
        %v1874 = vmax.f32 %v1872, %v1777
        %v1875 = vmax.f32 %v1873, %v1779
        %v1876 = vmax.f32 %v1874, %v1782
        %v1877 = vmax.f32 %v1875, %v1784
        %v1878 = vmax.f32 %v1876, %v1787
        %v1879 = vmax.f32 %v1877, %v1789
        %v1880 = vmax.f32 %v1878, %v1792
        %v1881 = vmax.f32 %v1879, %v1794
        %v1882 = vmax.f32 %v1880, %v1797
        %v1883 = vmax.f32 %v1881, %v1799
        %v1884 = vmax.f32 %v1882, %v1802
        %v1885 = vmax.f32 %v1883, %v1804
        %v1886 = vmax.f32 %v1884, %v1807
        %v1887 = vmax.f32 %v1885, %v1809
        %v1888 = vmax.f32 %v1886, %v1812
        %v1889 = vmax.f32 %v1887, %v1814
        %v1890 = vmax.f32 %v1888, %v1817
        %v1891 = vmax.f32 %v1889, %v1819
        %v1892 = vmax.f32 %v1890, %v1822
        %v1893 = vmax.f32 %v1891, %v1824
        %v1894 = vmax.f32 %v1892, %v1893
        %v1895 = vrot.slane %v1894, 4
        %v1896 = vmax.f32 %v1894, %v1895
        %v1897 = vrot.slane %v1896, 2
        %v1898 = vmax.f32 %v1896, %v1897
        %v1899 = vrot.slane %v1898, 1
        %v1900 = vmax.f32 %v1898, %v1899
        %v1903 = vrot.slane %v1900, 7
        %v1904 = vsel %vm1047, %v1863, %v1903
        %v1906 = vmax.f32 %v1826, %v1904
        %1907 = vst.msk [vmem:[#allocation2 + $0x6] sm:$0x3] %vm1054, %v1906
        %v1908 = vld [vmem:[%s3 + $0x20] sm:$0xff]
        %v1909 = vld [vmem:[%s3 + $0x48] sm:$0xff]
        %v1910 = vld [vmem:[%s3 + $0x70] sm:$0xff]
        %v1911 = vld [vmem:[%s3 + $0x98] sm:$0xff]
        %v1916 = vunpack.c.l.b16 %v1908
        %v1917 = vunpack.c.h.b16 %v1908
        %v1918 = vunpack.c.l.b16 %v1909
        %v1919 = vunpack.c.h.b16 %v1909
        %v1920 = vunpack.c.l.b16 %v1910
        %v1921 = vunpack.c.h.b16 %v1910
        %v1922 = vunpack.c.l.b16 %v1911
        %v1923 = vunpack.c.h.b16 %v1911
        %v1924 = vpack.c.b16 %v1918, %v1916
        %v1925 = vpack.c.b16 %v1919, %v1917
        %v1926 = vpack.c.b16 %v1922, %v1920
        %v1927 = vpack.c.b16 %v1923, %v1921
        %1932 = vmatpush.bf16.msra.mxu0 0
        %1933 = vmatpush.bf16.msra.mxu0 0
        %1934 = vmatpush.bf16.msra.mxu0 0
        %1935 = vmatpush.bf16.msra.mxu0 0
        %1936 = vmatpush.bf16.msra.mxu0 0
        %1937 = vmatpush.bf16.msra.mxu0 0
        %1938 = vmatpush.bf16.msra.mxu0 %v1926
        %1939 = vmatpush.bf16.msra.mxu0 %v1924
        %1940 = vmatmul.bf16.gmra.mxu0 %v744
        %v1941 = vpop.f32.mrf.mxu0
        %v1942 = vadd.f32 0.0, %v1941
        %v1943 = vpop.f32.mrf.mxu0
        %v1944 = vadd.f32 0.0, %v1943
        %1945 = vmatmul.bf16.gmra.mxu0 %v747
        %v1946 = vpop.f32.mrf.mxu0
        %v1947 = vadd.f32 0.0, %v1946
        %v1948 = vpop.f32.mrf.mxu0
        %v1949 = vadd.f32 0.0, %v1948
        %1950 = vmatmul.bf16.gmra.mxu0 %v750
        %v1951 = vpop.f32.mrf.mxu0
        %v1952 = vadd.f32 0.0, %v1951
        %v1953 = vpop.f32.mrf.mxu0
        %v1954 = vadd.f32 0.0, %v1953
        %1955 = vmatmul.bf16.gmra.mxu0 %v753
        %v1956 = vpop.f32.mrf.mxu0
        %v1957 = vadd.f32 0.0, %v1956
        %v1958 = vpop.f32.mrf.mxu0
        %v1959 = vadd.f32 0.0, %v1958
        %1960 = vmatmul.bf16.gmra.mxu0 %v756
        %v1961 = vpop.f32.mrf.mxu0
        %v1962 = vadd.f32 0.0, %v1961
        %v1963 = vpop.f32.mrf.mxu0
        %v1964 = vadd.f32 0.0, %v1963
        %1965 = vmatmul.bf16.gmra.mxu0 %v759
        %v1966 = vpop.f32.mrf.mxu0
        %v1967 = vadd.f32 0.0, %v1966
        %v1968 = vpop.f32.mrf.mxu0
        %v1969 = vadd.f32 0.0, %v1968
        %1970 = vmatmul.bf16.gmra.mxu0 %v762
        %v1971 = vpop.f32.mrf.mxu0
        %v1972 = vadd.f32 0.0, %v1971
        %v1973 = vpop.f32.mrf.mxu0
        %v1974 = vadd.f32 0.0, %v1973
        %1975 = vmatmul.bf16.gmra.mxu0 %v765
        %v1976 = vpop.f32.mrf.mxu0
        %v1977 = vadd.f32 0.0, %v1976
        %v1978 = vpop.f32.mrf.mxu0
        %v1979 = vadd.f32 0.0, %v1978
        %1980 = vmatmul.bf16.gmra.mxu0 %v768
        %v1981 = vpop.f32.mrf.mxu0
        %v1982 = vadd.f32 0.0, %v1981
        %v1983 = vpop.f32.mrf.mxu0
        %v1984 = vadd.f32 0.0, %v1983
        %1985 = vmatmul.bf16.gmra.mxu0 %v771
        %v1986 = vpop.f32.mrf.mxu0
        %v1987 = vadd.f32 0.0, %v1986
        %v1988 = vpop.f32.mrf.mxu0
        %v1989 = vadd.f32 0.0, %v1988
        %1990 = vmatmul.bf16.gmra.mxu0 %v774
        %v1991 = vpop.f32.mrf.mxu0
        %v1992 = vadd.f32 0.0, %v1991
        %v1993 = vpop.f32.mrf.mxu0
        %v1994 = vadd.f32 0.0, %v1993
        %1995 = vmatmul.bf16.gmra.mxu0 %v777
        %v1996 = vpop.f32.mrf.mxu0
        %v1997 = vadd.f32 0.0, %v1996
        %v1998 = vpop.f32.mrf.mxu0
        %v1999 = vadd.f32 0.0, %v1998
        %2000 = vmatmul.bf16.gmra.mxu0 %v780
        %v2001 = vpop.f32.mrf.mxu0
        %v2002 = vadd.f32 0.0, %v2001
        %v2003 = vpop.f32.mrf.mxu0
        %v2004 = vadd.f32 0.0, %v2003
        %2005 = vmatmul.bf16.gmra.mxu0 %v783
        %v2006 = vpop.f32.mrf.mxu0
        %v2007 = vadd.f32 0.0, %v2006
        %v2008 = vpop.f32.mrf.mxu0
        %v2009 = vadd.f32 0.0, %v2008
        %2010 = vmatmul.bf16.gmra.mxu0 %v786
        %v2011 = vpop.f32.mrf.mxu0
        %v2012 = vadd.f32 0.0, %v2011
        %v2013 = vpop.f32.mrf.mxu0
        %v2014 = vadd.f32 0.0, %v2013
        %2015 = vmatmul.bf16.gmra.mxu0 %v789
        %v2016 = vpop.f32.mrf.mxu0
        %v2017 = vadd.f32 0.0, %v2016
        %v2018 = vpop.f32.mrf.mxu0
        %v2019 = vadd.f32 0.0, %v2018
        %2020 = vdwg.mxu0
        %2021 = vmatpush.bf16.msra.mxu0 0
        %2022 = vmatpush.bf16.msra.mxu0 0
        %2023 = vmatpush.bf16.msra.mxu0 0
        %2024 = vmatpush.bf16.msra.mxu0 0
        %2025 = vmatpush.bf16.msra.mxu0 0
        %2026 = vmatpush.bf16.msra.mxu0 0
        %2027 = vmatpush.bf16.msra.mxu0 %v1927
        %2028 = vmatpush.bf16.msra.mxu0 %v1925
        %2029 = vmatmul.bf16.gmra.mxu0 %v744
        %v2030 = vpop.f32.mrf.mxu0
        %v2031 = vadd.f32 0.0, %v2030
        %v2032 = vpop.f32.mrf.mxu0
        %v2033 = vadd.f32 0.0, %v2032
        %2034 = vmatmul.bf16.gmra.mxu0 %v747
        %v2035 = vpop.f32.mrf.mxu0
        %v2036 = vadd.f32 0.0, %v2035
        %v2037 = vpop.f32.mrf.mxu0
        %v2038 = vadd.f32 0.0, %v2037
        %2039 = vmatmul.bf16.gmra.mxu0 %v750
        %v2040 = vpop.f32.mrf.mxu0
        %v2041 = vadd.f32 0.0, %v2040
        %v2042 = vpop.f32.mrf.mxu0
        %v2043 = vadd.f32 0.0, %v2042
        %2044 = vmatmul.bf16.gmra.mxu0 %v753
        %v2045 = vpop.f32.mrf.mxu0
        %v2046 = vadd.f32 0.0, %v2045
        %v2047 = vpop.f32.mrf.mxu0
        %v2048 = vadd.f32 0.0, %v2047
        %2049 = vmatmul.bf16.gmra.mxu0 %v756
        %v2050 = vpop.f32.mrf.mxu0
        %v2051 = vadd.f32 0.0, %v2050
        %v2052 = vpop.f32.mrf.mxu0
        %v2053 = vadd.f32 0.0, %v2052
        %2054 = vmatmul.bf16.gmra.mxu0 %v759
        %v2055 = vpop.f32.mrf.mxu0
        %v2056 = vadd.f32 0.0, %v2055
        %v2057 = vpop.f32.mrf.mxu0
        %v2058 = vadd.f32 0.0, %v2057
        %2059 = vmatmul.bf16.gmra.mxu0 %v762
        %v2060 = vpop.f32.mrf.mxu0
        %v2061 = vadd.f32 0.0, %v2060
        %v2062 = vpop.f32.mrf.mxu0
        %v2063 = vadd.f32 0.0, %v2062
        %2064 = vmatmul.bf16.gmra.mxu0 %v765
        %v2065 = vpop.f32.mrf.mxu0
        %v2066 = vadd.f32 0.0, %v2065
        %v2067 = vpop.f32.mrf.mxu0
        %v2068 = vadd.f32 0.0, %v2067
        %2069 = vmatmul.bf16.gmra.mxu0 %v768
        %v2070 = vpop.f32.mrf.mxu0
        %v2071 = vadd.f32 0.0, %v2070
        %v2072 = vpop.f32.mrf.mxu0
        %v2073 = vadd.f32 0.0, %v2072
        %2074 = vmatmul.bf16.gmra.mxu0 %v771
        %v2075 = vpop.f32.mrf.mxu0
        %v2076 = vadd.f32 0.0, %v2075
        %v2077 = vpop.f32.mrf.mxu0
        %v2078 = vadd.f32 0.0, %v2077
        %2079 = vmatmul.bf16.gmra.mxu0 %v774
        %v2080 = vpop.f32.mrf.mxu0
        %v2081 = vadd.f32 0.0, %v2080
        %v2082 = vpop.f32.mrf.mxu0
        %v2083 = vadd.f32 0.0, %v2082
        %2084 = vmatmul.bf16.gmra.mxu0 %v777
        %v2085 = vpop.f32.mrf.mxu0
        %v2086 = vadd.f32 0.0, %v2085
        %v2087 = vpop.f32.mrf.mxu0
        %v2088 = vadd.f32 0.0, %v2087
        %2089 = vmatmul.bf16.gmra.mxu0 %v780
        %v2090 = vpop.f32.mrf.mxu0
        %v2091 = vadd.f32 0.0, %v2090
        %v2092 = vpop.f32.mrf.mxu0
        %v2093 = vadd.f32 0.0, %v2092
        %2094 = vmatmul.bf16.gmra.mxu0 %v783
        %v2095 = vpop.f32.mrf.mxu0
        %v2096 = vadd.f32 0.0, %v2095
        %v2097 = vpop.f32.mrf.mxu0
        %v2098 = vadd.f32 0.0, %v2097
        %2099 = vmatmul.bf16.gmra.mxu0 %v786
        %v2100 = vpop.f32.mrf.mxu0
        %v2101 = vadd.f32 0.0, %v2100
        %v2102 = vpop.f32.mrf.mxu0
        %v2103 = vadd.f32 0.0, %v2102
        %2104 = vmatmul.bf16.gmra.mxu0 %v789
        %v2105 = vpop.f32.mrf.mxu0
        %v2106 = vadd.f32 0.0, %v2105
        %v2107 = vpop.f32.mrf.mxu0
        %v2108 = vadd.f32 0.0, %v2107
        %2109 = vdwg.mxu0
        %v2110 = vld [vmem:[#allocation2 + $0x8] sm:$0x3]
        %v2111 = vmax.f32 %v1942, %v1947
        %v2112 = vmax.f32 %v1944, %v1949
        %v2113 = vmax.f32 %v2111, %v1952
        %v2114 = vmax.f32 %v2112, %v1954
        %v2115 = vmax.f32 %v2113, %v1957
        %v2116 = vmax.f32 %v2114, %v1959
        %v2117 = vmax.f32 %v2115, %v1962
        %v2118 = vmax.f32 %v2116, %v1964
        %v2119 = vmax.f32 %v2117, %v1967
        %v2120 = vmax.f32 %v2118, %v1969
        %v2121 = vmax.f32 %v2119, %v1972
        %v2122 = vmax.f32 %v2120, %v1974
        %v2123 = vmax.f32 %v2121, %v1977
        %v2124 = vmax.f32 %v2122, %v1979
        %v2125 = vmax.f32 %v2123, %v1982
        %v2126 = vmax.f32 %v2124, %v1984
        %v2127 = vmax.f32 %v2125, %v1987
        %v2128 = vmax.f32 %v2126, %v1989
        %v2129 = vmax.f32 %v2127, %v1992
        %v2130 = vmax.f32 %v2128, %v1994
        %v2131 = vmax.f32 %v2129, %v1997
        %v2132 = vmax.f32 %v2130, %v1999
        %v2133 = vmax.f32 %v2131, %v2002
        %v2134 = vmax.f32 %v2132, %v2004
        %v2135 = vmax.f32 %v2133, %v2007
        %v2136 = vmax.f32 %v2134, %v2009
        %v2137 = vmax.f32 %v2135, %v2012
        %v2138 = vmax.f32 %v2136, %v2014
        %v2139 = vmax.f32 %v2137, %v2017
        %v2140 = vmax.f32 %v2138, %v2019
        %v2141 = vmax.f32 %v2139, %v2140
        %v2142 = vrot.slane %v2141, 4
        %v2143 = vmax.f32 %v2141, %v2142
        %v2144 = vrot.slane %v2143, 2
        %v2145 = vmax.f32 %v2143, %v2144
        %v2146 = vrot.slane %v2145, 1
        %v2147 = vmax.f32 %v2145, %v2146
        %v2148 = vmax.f32 %v2031, %v2036
        %v2149 = vmax.f32 %v2033, %v2038
        %v2150 = vmax.f32 %v2148, %v2041
        %v2151 = vmax.f32 %v2149, %v2043
        %v2152 = vmax.f32 %v2150, %v2046
        %v2153 = vmax.f32 %v2151, %v2048
        %v2154 = vmax.f32 %v2152, %v2051
        %v2155 = vmax.f32 %v2153, %v2053
        %v2156 = vmax.f32 %v2154, %v2056
        %v2157 = vmax.f32 %v2155, %v2058
        %v2158 = vmax.f32 %v2156, %v2061
        %v2159 = vmax.f32 %v2157, %v2063
        %v2160 = vmax.f32 %v2158, %v2066
        %v2161 = vmax.f32 %v2159, %v2068
        %v2162 = vmax.f32 %v2160, %v2071
        %v2163 = vmax.f32 %v2161, %v2073
        %v2164 = vmax.f32 %v2162, %v2076
        %v2165 = vmax.f32 %v2163, %v2078
        %v2166 = vmax.f32 %v2164, %v2081
        %v2167 = vmax.f32 %v2165, %v2083
        %v2168 = vmax.f32 %v2166, %v2086
        %v2169 = vmax.f32 %v2167, %v2088
        %v2170 = vmax.f32 %v2168, %v2091
        %v2171 = vmax.f32 %v2169, %v2093
        %v2172 = vmax.f32 %v2170, %v2096
        %v2173 = vmax.f32 %v2171, %v2098
        %v2174 = vmax.f32 %v2172, %v2101
        %v2175 = vmax.f32 %v2173, %v2103
        %v2176 = vmax.f32 %v2174, %v2106
        %v2177 = vmax.f32 %v2175, %v2108
        %v2178 = vmax.f32 %v2176, %v2177
        %v2179 = vrot.slane %v2178, 4
        %v2180 = vmax.f32 %v2178, %v2179
        %v2181 = vrot.slane %v2180, 2
        %v2182 = vmax.f32 %v2180, %v2181
        %v2183 = vrot.slane %v2182, 1
        %v2184 = vmax.f32 %v2182, %v2183
        %v2187 = vrot.slane %v2184, 7
        %v2188 = vsel %vm1047, %v2147, %v2187
        %v2190 = vmax.f32 %v2110, %v2188
        %2191 = vst.msk [vmem:[#allocation2 + $0x8] sm:$0x3] %vm1054, %v2190
        %p2192 = scmp.eq.s32.totalorder %s29, 1
        // Predicated region
        $region103: #{tpu_custom_call.1} parent=93 // pred_check
          %p2193 = pneg %p2192
        $region104: #{tpu_custom_call.1} parent=93 // pred_check_branch
          %2195 = sbr.rel (%p2193) target = $region106
        $region105: #{tpu_custom_call.1} parent=93 // pred_region
          %v2196 = vld [vmem:[#allocation2] sm:$0xff]
          %v2197 = vld [vmem:[#allocation2 + $0x8] sm:$0x3]
          %v2198 = vld [vmem:[%s4] sm:$0xff]
          %v2199 = vld [vmem:[%s4 + $0x8] sm:$0x3]
          %v2200 = vadd.f32 %v2196, %v2198
          %v2201 = vadd.f32 %v2197, %v2199
          %v2202 = vmax.f32 %v2200, 0.0
          %v2203 = vmax.f32 %v2201, 0.0
          %v2204 = vmin.f32 %v2202, 6.0
          %v2205 = vmin.f32 %v2203, 6.0
          %v2208 = vperm.slane %v2204, 0
          %v2209 = vperm.slane %v2204, 1
          %v2210 = vperm.slane %v2204, 2
          %v2211 = vperm.slane %v2204, 3
          %v2212 = vperm.slane %v2204, 4
          %v2213 = vperm.slane %v2204, 5
          %v2214 = vperm.slane %v2204, 6
          %v2215 = vperm.slane %v2204, 7
          %v2216 = vperm.slane %v2205, 0
          %v2217 = vperm.slane %v2205, 1
          %v2228 = vsel %vm1047, %v2208, 0.0
          %v2229 = vsel %vm1047, %v2209, 0.0
          %v2230 = vadd.f32 %v2228, %v2229
          %v2231 = vsel %vm1047, %v2210, 0.0
          %v2232 = vadd.f32 %v2230, %v2231
          %v2233 = vsel %vm1047, %v2211, 0.0
          %v2234 = vadd.f32 %v2232, %v2233
          %v2235 = vsel %vm1047, %v2212, 0.0
          %v2236 = vadd.f32 %v2234, %v2235
          %v2237 = vsel %vm1047, %v2213, 0.0
          %v2238 = vadd.f32 %v2236, %v2237
          %v2239 = vsel %vm1047, %v2214, 0.0
          %v2240 = vadd.f32 %v2238, %v2239
          %v2241 = vsel %vm1047, %v2215, 0.0
          %v2242 = vadd.f32 %v2240, %v2241
          %v2243 = vsel %vm1047, %v2216, 0.0
          %v2244 = vadd.f32 %v2242, %v2243
          %v2245 = vsel %vm1047, %v2217, 0.0
          %v2246 = vadd.f32 %v2244, %v2245
          %2247 = vadd.xlane.f32.xlu0 %v2246
          %v2248 = vpop.xlane.xlu0 %2247
          %v2249 = vrcp.pop 1280.0
          %v2250 = vmul.f32 1280.0, %v2249
          %v2251 = vsub.f32 1.0, %v2250
          %v2252 = vmul.f32 %v2249, %v2251
          %v2253 = vadd.f32 %v2249, %v2252
          %vm2254 = vweird.f32 %v2249
          %v2255 = vsel %vm2254, %v2249, %v2253
          %v2256 = vmul.f32 %v2248, %v2255
          %v2258 = vperm.slane %v2256, 0
          %v2260 = vsub.f32 %v2204, %v2258
          %v2261 = vsub.f32 %v2205, %v2258
          %v2262 = vmul.f32 %v2260, %v2260
          %v2263 = vmul.f32 %v2261, %v2261
          %v2266 = vperm.slane %v2262, 0
          %v2267 = vperm.slane %v2262, 1
          %v2268 = vperm.slane %v2262, 2
          %v2269 = vperm.slane %v2262, 3
          %v2270 = vperm.slane %v2262, 4
          %v2271 = vperm.slane %v2262, 5
          %v2272 = vperm.slane %v2262, 6
          %v2273 = vperm.slane %v2262, 7
          %v2274 = vperm.slane %v2263, 0
          %v2275 = vperm.slane %v2263, 1
          %v2286 = vsel %vm1047, %v2266, 0.0
          %v2287 = vsel %vm1047, %v2267, 0.0
          %v2288 = vadd.f32 %v2286, %v2287
          %v2289 = vsel %vm1047, %v2268, 0.0
          %v2290 = vadd.f32 %v2288, %v2289
          %v2291 = vsel %vm1047, %v2269, 0.0
          %v2292 = vadd.f32 %v2290, %v2291
          %v2293 = vsel %vm1047, %v2270, 0.0
          %v2294 = vadd.f32 %v2292, %v2293
          %v2295 = vsel %vm1047, %v2271, 0.0
          %v2296 = vadd.f32 %v2294, %v2295
          %v2297 = vsel %vm1047, %v2272, 0.0
          %v2298 = vadd.f32 %v2296, %v2297
          %v2299 = vsel %vm1047, %v2273, 0.0
          %v2300 = vadd.f32 %v2298, %v2299
          %v2301 = vsel %vm1047, %v2274, 0.0
          %v2302 = vadd.f32 %v2300, %v2301
          %v2303 = vsel %vm1047, %v2275, 0.0
          %v2304 = vadd.f32 %v2302, %v2303
          %2305 = vadd.xlane.f32.xlu0 %v2304
          %v2306 = vpop.xlane.xlu0 %2305
          %v2307 = vmul.f32 %v2306, %v2255
          %v2308 = vadd.f32 %v2307, 1e-05
          %v2309 = vrsqrt.pop %v2308
          %v2310 = vmul.f32 %v2309, %v2308
          %v2311 = vmul.f32 %v2310, %v2309
          %v2312 = vmul.f32 0.5, %v2311
          %v2313 = vsub.f32 1.5, %v2312
          %v2314 = vmul.f32 %v2309, %v2313
          %vm2315 = vweird.f32 %v2308
          %vm2316 = vweird.f32 %v2309
          %vm2317 = vmor %vm2315, %vm2316
          %v2318 = vsel %vm2317, %v2309, %v2314
          %v2320 = vperm.slane %v2318, 0
          %v2322 = vmul.f32 %v2260, %v2320
          %v2323 = vmul.f32 %v2261, %v2320
          %v2324 = vld [vmem:[%s5] sm:$0xff]
          %v2325 = vld [vmem:[%s5 + $0x8] sm:$0x3]
          %v2326 = vmul.f32 %v2322, %v2324
          %v2327 = vmul.f32 %v2323, %v2325
          %v2328 = vld [vmem:[%s6] sm:$0xff]
          %v2329 = vld [vmem:[%s6 + $0x8] sm:$0x3]
          %v2330 = vadd.f32 %v2326, %v2328
          %v2331 = vadd.f32 %v2327, %v2329
          %v2332 = vld [vmem:[%s7] sm:$0xff]
          %v2333 = vld [vmem:[%s7 + $0x8] sm:$0xff]
          %v2334 = vld [vmem:[%s7 + $0x10] sm:$0xff]
          %v2335 = vld [vmem:[%s7 + $0x18] sm:$0xff]
          %v2336 = vld [vmem:[%s7 + $0x20] sm:$0xff]
          %v2337 = vld [vmem:[%s7 + $0x28] sm:$0xff]
          %v2338 = vld [vmem:[%s7 + $0x30] sm:$0xff]
          %v2339 = vld [vmem:[%s7 + $0x38] sm:$0xff]
          %v2340 = vld [vmem:[%s7 + $0x40] sm:$0xff]
          %v2341 = vld [vmem:[%s7 + $0x48] sm:$0xff]
          %v2342 = vld [vmem:[%s7 + $0x50] sm:$0xff]
          %v2343 = vld [vmem:[%s7 + $0x58] sm:$0xff]
          %v2344 = vld [vmem:[%s7 + $0x60] sm:$0xff]
          %v2345 = vld [vmem:[%s7 + $0x68] sm:$0xff]
          %v2346 = vld [vmem:[%s7 + $0x70] sm:$0xff]
          %v2347 = vld [vmem:[%s7 + $0x78] sm:$0xff]
          %v2348 = vld [vmem:[%s7 + $0x80] sm:$0xff]
          %v2349 = vld [vmem:[%s7 + $0x88] sm:$0xff]
          %v2350 = vld [vmem:[%s7 + $0x90] sm:$0xff]
          %v2351 = vld [vmem:[%s7 + $0x98] sm:$0xff]
          %v2352 = vld [vmem:[%s7 + $0xa0] sm:$0xff]
          %v2353 = vld [vmem:[%s7 + $0xa8] sm:$0xff]
          %v2354 = vld [vmem:[%s7 + $0xb0] sm:$0xff]
          %v2355 = vld [vmem:[%s7 + $0xb8] sm:$0xff]
          %v2356 = vld [vmem:[%s7 + $0xc0] sm:$0xff]
          %v2357 = vld [vmem:[%s7 + $0xc8] sm:$0xff]
          %v2358 = vld [vmem:[%s7 + $0xd0] sm:$0xff]
          %v2359 = vld [vmem:[%s7 + $0xd8] sm:$0xff]
          %v2360 = vld [vmem:[%s7 + $0xe0] sm:$0xff]
          %v2361 = vld [vmem:[%s7 + $0xe8] sm:$0xff]
          %v2362 = vld [vmem:[%s7 + $0xf0] sm:$0xff]
          %v2363 = vld [vmem:[%s7 + $0xf8] sm:$0xff]
          %v2364 = vld [vmem:[%s7 + $0x100] sm:$0xff]
          %v2365 = vld [vmem:[%s7 + $0x108] sm:$0xff]
          %v2366 = vld [vmem:[%s7 + $0x110] sm:$0xff]
          %v2367 = vld [vmem:[%s7 + $0x118] sm:$0xff]
          %v2368 = vld [vmem:[%s7 + $0x120] sm:$0xff]
          %v2369 = vld [vmem:[%s7 + $0x128] sm:$0xff]
          %v2370 = vld [vmem:[%s7 + $0x130] sm:$0xff]
          %v2371 = vld [vmem:[%s7 + $0x138] sm:$0xff]
          %v2372 = vld [vmem:[%s7 + $0x140] sm:$0xff]
          %v2373 = vld [vmem:[%s7 + $0x148] sm:$0xff]
          %v2374 = vld [vmem:[%s7 + $0x150] sm:$0xff]
          %v2375 = vld [vmem:[%s7 + $0x158] sm:$0xff]
          %v2376 = vld [vmem:[%s7 + $0x160] sm:$0xff]
          %v2377 = vld [vmem:[%s7 + $0x168] sm:$0xff]
          %v2378 = vld [vmem:[%s7 + $0x170] sm:$0xff]
          %v2379 = vld [vmem:[%s7 + $0x178] sm:$0xff]
          %v2380 = vld [vmem:[%s7 + $0x180] sm:$0xff]
          %v2381 = vld [vmem:[%s7 + $0x188] sm:$0xff]
          %v2382 = vld [vmem:[%s7 + $0x190] sm:$0xff]
          %v2383 = vld [vmem:[%s7 + $0x198] sm:$0xff]
          %v2384 = vld [vmem:[%s7 + $0x1a0] sm:$0xff]
          %v2385 = vld [vmem:[%s7 + $0x1a8] sm:$0xff]
          %v2386 = vld [vmem:[%s7 + $0x1b0] sm:$0xff]
          %v2387 = vld [vmem:[%s7 + $0x1b8] sm:$0xff]
          %v2388 = vld [vmem:[%s7 + $0x1c0] sm:$0xff]
          %v2389 = vld [vmem:[%s7 + $0x1c8] sm:$0xff]
          %v2390 = vld [vmem:[%s7 + $0x1d0] sm:$0xff]
          %v2391 = vld [vmem:[%s7 + $0x1d8] sm:$0xff]
          %v2392 = vld [vmem:[%s7 + $0x1e0] sm:$0xff]
          %v2393 = vld [vmem:[%s7 + $0x1e8] sm:$0xff]
          %v2394 = vld [vmem:[%s7 + $0x1f0] sm:$0xff]
          %v2395 = vld [vmem:[%s7 + $0x1f8] sm:$0xff]
          %v2396 = vld [vmem:[%s7 + $0x200] sm:$0xff]
          %v2397 = vld [vmem:[%s7 + $0x208] sm:$0xff]
          %v2398 = vld [vmem:[%s7 + $0x210] sm:$0xff]
          %v2399 = vld [vmem:[%s7 + $0x218] sm:$0xff]
          %v2400 = vld [vmem:[%s7 + $0x220] sm:$0xff]
          %v2401 = vld [vmem:[%s7 + $0x228] sm:$0xff]
          %v2402 = vld [vmem:[%s7 + $0x230] sm:$0xff]
          %v2403 = vld [vmem:[%s7 + $0x238] sm:$0xff]
          %v2404 = vld [vmem:[%s7 + $0x240] sm:$0xff]
          %v2405 = vld [vmem:[%s7 + $0x248] sm:$0xff]
          %v2406 = vld [vmem:[%s7 + $0x250] sm:$0xff]
          %v2407 = vld [vmem:[%s7 + $0x258] sm:$0xff]
          %v2408 = vld [vmem:[%s7 + $0x260] sm:$0xff]
          %v2409 = vld [vmem:[%s7 + $0x268] sm:$0xff]
          %v2410 = vld [vmem:[%s7 + $0x270] sm:$0xff]
          %v2411 = vld [vmem:[%s7 + $0x278] sm:$0xff]
          %v2412 = vld [vmem:[%s7 + $0x280] sm:$0xff]
          %v2413 = vld [vmem:[%s7 + $0x288] sm:$0xff]
          %v2414 = vld [vmem:[%s7 + $0x290] sm:$0xff]
          %v2415 = vld [vmem:[%s7 + $0x298] sm:$0xff]
          %v2416 = vld [vmem:[%s7 + $0x2a0] sm:$0xff]
          %v2417 = vld [vmem:[%s7 + $0x2a8] sm:$0xff]
          %v2418 = vld [vmem:[%s7 + $0x2b0] sm:$0xff]
          %v2419 = vld [vmem:[%s7 + $0x2b8] sm:$0xff]
          %v2420 = vld [vmem:[%s7 + $0x2c0] sm:$0xff]
          %v2421 = vld [vmem:[%s7 + $0x2c8] sm:$0xff]
          %v2422 = vld [vmem:[%s7 + $0x2d0] sm:$0xff]
          %v2423 = vld [vmem:[%s7 + $0x2d8] sm:$0xff]
          %v2424 = vld [vmem:[%s7 + $0x2e0] sm:$0xff]
          %v2425 = vld [vmem:[%s7 + $0x2e8] sm:$0xff]
          %v2426 = vld [vmem:[%s7 + $0x2f0] sm:$0xff]
          %v2427 = vld [vmem:[%s7 + $0x2f8] sm:$0xff]
          %v2428 = vld [vmem:[%s7 + $0x300] sm:$0xff]
          %v2429 = vld [vmem:[%s7 + $0x308] sm:$0xff]
          %v2430 = vld [vmem:[%s7 + $0x310] sm:$0xff]
          %v2431 = vld [vmem:[%s7 + $0x318] sm:$0xff]
          %v2432 = vld [vmem:[%s7 + $0x320] sm:$0xff]
          %v2433 = vld [vmem:[%s7 + $0x328] sm:$0xff]
          %v2434 = vld [vmem:[%s7 + $0x330] sm:$0xff]
          %v2435 = vld [vmem:[%s7 + $0x338] sm:$0xff]
          %v2436 = vld [vmem:[%s7 + $0x340] sm:$0xff]
          %v2437 = vld [vmem:[%s7 + $0x348] sm:$0xff]
          %v2438 = vld [vmem:[%s7 + $0x350] sm:$0xff]
          %v2439 = vld [vmem:[%s7 + $0x358] sm:$0xff]
          %v2440 = vld [vmem:[%s7 + $0x360] sm:$0xff]
          %v2441 = vld [vmem:[%s7 + $0x368] sm:$0xff]
          %v2442 = vld [vmem:[%s7 + $0x370] sm:$0xff]
          %v2443 = vld [vmem:[%s7 + $0x378] sm:$0xff]
          %v2444 = vld [vmem:[%s7 + $0x380] sm:$0xff]
          %v2445 = vld [vmem:[%s7 + $0x388] sm:$0xff]
          %v2446 = vld [vmem:[%s7 + $0x390] sm:$0xff]
          %v2447 = vld [vmem:[%s7 + $0x398] sm:$0xff]
          %v2448 = vld [vmem:[%s7 + $0x3a0] sm:$0xff]
          %v2449 = vld [vmem:[%s7 + $0x3a8] sm:$0xff]
          %v2450 = vld [vmem:[%s7 + $0x3b0] sm:$0xff]
          %v2451 = vld [vmem:[%s7 + $0x3b8] sm:$0xff]
          %v2452 = vld [vmem:[%s7 + $0x3c0] sm:$0xff]
          %v2453 = vld [vmem:[%s7 + $0x3c8] sm:$0xff]
          %v2454 = vld [vmem:[%s7 + $0x3d0] sm:$0xff]
          %v2455 = vld [vmem:[%s7 + $0x3d8] sm:$0xff]
          %v2456 = vld [vmem:[%s7 + $0x3e0] sm:$0xff]
          %v2457 = vld [vmem:[%s7 + $0x3e8] sm:$0xff]
          %v2458 = vld [vmem:[%s7 + $0x3f0] sm:$0xff]
          %v2459 = vld [vmem:[%s7 + $0x3f8] sm:$0xff]
          %v2460 = vld [vmem:[%s7 + $0x400] sm:$0xff]
          %v2461 = vld [vmem:[%s7 + $0x408] sm:$0xff]
          %v2462 = vld [vmem:[%s7 + $0x410] sm:$0xff]
          %v2463 = vld [vmem:[%s7 + $0x418] sm:$0xff]
          %v2464 = vld [vmem:[%s7 + $0x420] sm:$0xff]
          %v2465 = vld [vmem:[%s7 + $0x428] sm:$0xff]
          %v2466 = vld [vmem:[%s7 + $0x430] sm:$0xff]
          %v2467 = vld [vmem:[%s7 + $0x438] sm:$0xff]
          %v2468 = vld [vmem:[%s7 + $0x440] sm:$0xff]
          %v2469 = vld [vmem:[%s7 + $0x448] sm:$0xff]
          %v2470 = vld [vmem:[%s7 + $0x450] sm:$0xff]
          %v2471 = vld [vmem:[%s7 + $0x458] sm:$0xff]
          %v2472 = vld [vmem:[%s7 + $0x460] sm:$0xff]
          %v2473 = vld [vmem:[%s7 + $0x468] sm:$0xff]
          %v2474 = vld [vmem:[%s7 + $0x470] sm:$0xff]
          %v2475 = vld [vmem:[%s7 + $0x478] sm:$0xff]
          %v2476 = vld [vmem:[%s7 + $0x480] sm:$0xff]
          %v2477 = vld [vmem:[%s7 + $0x488] sm:$0xff]
          %v2478 = vld [vmem:[%s7 + $0x490] sm:$0xff]
          %v2479 = vld [vmem:[%s7 + $0x498] sm:$0xff]
          %v2480 = vld [vmem:[%s7 + $0x4a0] sm:$0xff]
          %v2481 = vld [vmem:[%s7 + $0x4a8] sm:$0xff]
          %v2482 = vld [vmem:[%s7 + $0x4b0] sm:$0xff]
          %v2483 = vld [vmem:[%s7 + $0x4b8] sm:$0xff]
          %v2484 = vld [vmem:[%s7 + $0x4c0] sm:$0xff]
          %v2485 = vld [vmem:[%s7 + $0x4c8] sm:$0xff]
          %v2486 = vld [vmem:[%s7 + $0x4d0] sm:$0xff]
          %v2487 = vld [vmem:[%s7 + $0x4d8] sm:$0xff]
          %v2488 = vld [vmem:[%s7 + $0x4e0] sm:$0xff]
          %v2489 = vld [vmem:[%s7 + $0x4e8] sm:$0xff]
          %v2490 = vld [vmem:[%s7 + $0x4f0] sm:$0xff]
          %v2491 = vld [vmem:[%s7 + $0x4f8] sm:$0xff]
          %v2492 = vld [vmem:[%s8] sm:$0x1]
          %v2495 = vperm.slane %v2330, 0
          %v2496 = vperm.slane %v2330, 1
          %v2497 = vperm.slane %v2330, 2
          %v2498 = vperm.slane %v2330, 3
          %v2499 = vperm.slane %v2330, 4
          %v2500 = vperm.slane %v2330, 5
          %v2501 = vperm.slane %v2330, 6
          %v2502 = vperm.slane %v2330, 7
          %v2503 = vperm.slane %v2331, 0
          %v2504 = vperm.slane %v2331, 1
          %2515 = vmatpush.msra.mxu0 %v2347
          %2516 = vmatpush.msra.mxu0 %v2346
          %2517 = vmatpush.msra.mxu0 %v2345
          %2518 = vmatpush.msra.mxu0 %v2344
          %2519 = vmatpush.msra.mxu0 %v2343
          %2520 = vmatpush.msra.mxu0 %v2342
          %2521 = vmatpush.msra.mxu0 %v2341
          %2522 = vmatpush.msra.mxu0 %v2340
          %2523 = vmatpush.msra.mxu0 %v2339
          %2524 = vmatpush.msra.mxu0 %v2338
          %2525 = vmatpush.msra.mxu0 %v2337
          %2526 = vmatpush.msra.mxu0 %v2336
          %2527 = vmatpush.msra.mxu0 %v2335
          %2528 = vmatpush.msra.mxu0 %v2334
          %2529 = vmatpush.msra.mxu0 %v2333
          %2530 = vmatpush.msra.mxu0 %v2332
          %2531 = vmatmul.f32.gmra.mxu0 %v2495
          %v2532 = vpop.f32.mrf.mxu0
          %v2533 = vadd.f32 %v2492, %v2532
          %2534 = vdwg.mxu0
          %2535 = vmatpush.msra.mxu0 %v2363
          %2536 = vmatpush.msra.mxu0 %v2362
          %2537 = vmatpush.msra.mxu0 %v2361
          %2538 = vmatpush.msra.mxu0 %v2360
          %2539 = vmatpush.msra.mxu0 %v2359
          %2540 = vmatpush.msra.mxu0 %v2358
          %2541 = vmatpush.msra.mxu0 %v2357
          %2542 = vmatpush.msra.mxu0 %v2356
          %2543 = vmatpush.msra.mxu0 %v2355
          %2544 = vmatpush.msra.mxu0 %v2354
          %2545 = vmatpush.msra.mxu0 %v2353
          %2546 = vmatpush.msra.mxu0 %v2352
          %2547 = vmatpush.msra.mxu0 %v2351
          %2548 = vmatpush.msra.mxu0 %v2350
          %2549 = vmatpush.msra.mxu0 %v2349
          %2550 = vmatpush.msra.mxu0 %v2348
          %2551 = vmatmul.f32.gmra.mxu0 %v2496
          %v2552 = vpop.f32.mrf.mxu0
          %v2553 = vadd.f32 %v2533, %v2552
          %2554 = vdwg.mxu0
          %2555 = vmatpush.msra.mxu0 %v2379
          %2556 = vmatpush.msra.mxu0 %v2378
          %2557 = vmatpush.msra.mxu0 %v2377
          %2558 = vmatpush.msra.mxu0 %v2376
          %2559 = vmatpush.msra.mxu0 %v2375
          %2560 = vmatpush.msra.mxu0 %v2374
          %2561 = vmatpush.msra.mxu0 %v2373
          %2562 = vmatpush.msra.mxu0 %v2372
          %2563 = vmatpush.msra.mxu0 %v2371
          %2564 = vmatpush.msra.mxu0 %v2370
          %2565 = vmatpush.msra.mxu0 %v2369
          %2566 = vmatpush.msra.mxu0 %v2368
          %2567 = vmatpush.msra.mxu0 %v2367
          %2568 = vmatpush.msra.mxu0 %v2366
          %2569 = vmatpush.msra.mxu0 %v2365
          %2570 = vmatpush.msra.mxu0 %v2364
          %2571 = vmatmul.f32.gmra.mxu0 %v2497
          %v2572 = vpop.f32.mrf.mxu0
          %v2573 = vadd.f32 %v2553, %v2572
          %2574 = vdwg.mxu0
          %2575 = vmatpush.msra.mxu0 %v2395
          %2576 = vmatpush.msra.mxu0 %v2394
          %2577 = vmatpush.msra.mxu0 %v2393
          %2578 = vmatpush.msra.mxu0 %v2392
          %2579 = vmatpush.msra.mxu0 %v2391
          %2580 = vmatpush.msra.mxu0 %v2390
          %2581 = vmatpush.msra.mxu0 %v2389
          %2582 = vmatpush.msra.mxu0 %v2388
          %2583 = vmatpush.msra.mxu0 %v2387
          %2584 = vmatpush.msra.mxu0 %v2386
          %2585 = vmatpush.msra.mxu0 %v2385
          %2586 = vmatpush.msra.mxu0 %v2384
          %2587 = vmatpush.msra.mxu0 %v2383
          %2588 = vmatpush.msra.mxu0 %v2382
          %2589 = vmatpush.msra.mxu0 %v2381
          %2590 = vmatpush.msra.mxu0 %v2380
          %2591 = vmatmul.f32.gmra.mxu0 %v2498
          %v2592 = vpop.f32.mrf.mxu0
          %v2593 = vadd.f32 %v2573, %v2592
          %2594 = vdwg.mxu0
          %2595 = vmatpush.msra.mxu0 %v2411
          %2596 = vmatpush.msra.mxu0 %v2410
          %2597 = vmatpush.msra.mxu0 %v2409
          %2598 = vmatpush.msra.mxu0 %v2408
          %2599 = vmatpush.msra.mxu0 %v2407
          %2600 = vmatpush.msra.mxu0 %v2406
          %2601 = vmatpush.msra.mxu0 %v2405
          %2602 = vmatpush.msra.mxu0 %v2404
          %2603 = vmatpush.msra.mxu0 %v2403
          %2604 = vmatpush.msra.mxu0 %v2402
          %2605 = vmatpush.msra.mxu0 %v2401
          %2606 = vmatpush.msra.mxu0 %v2400
          %2607 = vmatpush.msra.mxu0 %v2399
          %2608 = vmatpush.msra.mxu0 %v2398
          %2609 = vmatpush.msra.mxu0 %v2397
          %2610 = vmatpush.msra.mxu0 %v2396
          %2611 = vmatmul.f32.gmra.mxu0 %v2499
          %v2612 = vpop.f32.mrf.mxu0
          %v2613 = vadd.f32 %v2593, %v2612
          %2614 = vdwg.mxu0
          %2615 = vmatpush.msra.mxu0 %v2427
          %2616 = vmatpush.msra.mxu0 %v2426
          %2617 = vmatpush.msra.mxu0 %v2425
          %2618 = vmatpush.msra.mxu0 %v2424
          %2619 = vmatpush.msra.mxu0 %v2423
          %2620 = vmatpush.msra.mxu0 %v2422
          %2621 = vmatpush.msra.mxu0 %v2421
          %2622 = vmatpush.msra.mxu0 %v2420
          %2623 = vmatpush.msra.mxu0 %v2419
          %2624 = vmatpush.msra.mxu0 %v2418
          %2625 = vmatpush.msra.mxu0 %v2417
          %2626 = vmatpush.msra.mxu0 %v2416
          %2627 = vmatpush.msra.mxu0 %v2415
          %2628 = vmatpush.msra.mxu0 %v2414
          %2629 = vmatpush.msra.mxu0 %v2413
          %2630 = vmatpush.msra.mxu0 %v2412
          %2631 = vmatmul.f32.gmra.mxu0 %v2500
          %v2632 = vpop.f32.mrf.mxu0
          %v2633 = vadd.f32 %v2613, %v2632
          %2634 = vdwg.mxu0
          %2635 = vmatpush.msra.mxu0 %v2443
          %2636 = vmatpush.msra.mxu0 %v2442
          %2637 = vmatpush.msra.mxu0 %v2441
          %2638 = vmatpush.msra.mxu0 %v2440
          %2639 = vmatpush.msra.mxu0 %v2439
          %2640 = vmatpush.msra.mxu0 %v2438
          %2641 = vmatpush.msra.mxu0 %v2437
          %2642 = vmatpush.msra.mxu0 %v2436
          %2643 = vmatpush.msra.mxu0 %v2435
          %2644 = vmatpush.msra.mxu0 %v2434
          %2645 = vmatpush.msra.mxu0 %v2433
          %2646 = vmatpush.msra.mxu0 %v2432
          %2647 = vmatpush.msra.mxu0 %v2431
          %2648 = vmatpush.msra.mxu0 %v2430
          %2649 = vmatpush.msra.mxu0 %v2429
          %2650 = vmatpush.msra.mxu0 %v2428
          %2651 = vmatmul.f32.gmra.mxu0 %v2501
          %v2652 = vpop.f32.mrf.mxu0
          %v2653 = vadd.f32 %v2633, %v2652
          %2654 = vdwg.mxu0
          %2655 = vmatpush.msra.mxu0 %v2459
          %2656 = vmatpush.msra.mxu0 %v2458
          %2657 = vmatpush.msra.mxu0 %v2457
          %2658 = vmatpush.msra.mxu0 %v2456
          %2659 = vmatpush.msra.mxu0 %v2455
          %2660 = vmatpush.msra.mxu0 %v2454
          %2661 = vmatpush.msra.mxu0 %v2453
          %2662 = vmatpush.msra.mxu0 %v2452
          %2663 = vmatpush.msra.mxu0 %v2451
          %2664 = vmatpush.msra.mxu0 %v2450
          %2665 = vmatpush.msra.mxu0 %v2449
          %2666 = vmatpush.msra.mxu0 %v2448
          %2667 = vmatpush.msra.mxu0 %v2447
          %2668 = vmatpush.msra.mxu0 %v2446
          %2669 = vmatpush.msra.mxu0 %v2445
          %2670 = vmatpush.msra.mxu0 %v2444
          %2671 = vmatmul.f32.gmra.mxu0 %v2502
          %v2672 = vpop.f32.mrf.mxu0
          %v2673 = vadd.f32 %v2653, %v2672
          %2674 = vdwg.mxu0
          %2675 = vmatpush.msra.mxu0 %v2475
          %2676 = vmatpush.msra.mxu0 %v2474
          %2677 = vmatpush.msra.mxu0 %v2473
          %2678 = vmatpush.msra.mxu0 %v2472
          %2679 = vmatpush.msra.mxu0 %v2471
          %2680 = vmatpush.msra.mxu0 %v2470
          %2681 = vmatpush.msra.mxu0 %v2469
          %2682 = vmatpush.msra.mxu0 %v2468
          %2683 = vmatpush.msra.mxu0 %v2467
          %2684 = vmatpush.msra.mxu0 %v2466
          %2685 = vmatpush.msra.mxu0 %v2465
          %2686 = vmatpush.msra.mxu0 %v2464
          %2687 = vmatpush.msra.mxu0 %v2463
          %2688 = vmatpush.msra.mxu0 %v2462
          %2689 = vmatpush.msra.mxu0 %v2461
          %2690 = vmatpush.msra.mxu0 %v2460
          %2691 = vmatmul.f32.gmra.mxu0 %v2503
          %v2692 = vpop.f32.mrf.mxu0
          %v2693 = vadd.f32 %v2673, %v2692
          %2694 = vdwg.mxu0
          %2695 = vmatpush.msra.mxu0 %v2491
          %2696 = vmatpush.msra.mxu0 %v2490
          %2697 = vmatpush.msra.mxu0 %v2489
          %2698 = vmatpush.msra.mxu0 %v2488
          %2699 = vmatpush.msra.mxu0 %v2487
          %2700 = vmatpush.msra.mxu0 %v2486
          %2701 = vmatpush.msra.mxu0 %v2485
          %2702 = vmatpush.msra.mxu0 %v2484
          %2703 = vmatpush.msra.mxu0 %v2483
          %2704 = vmatpush.msra.mxu0 %v2482
          %2705 = vmatpush.msra.mxu0 %v2481
          %2706 = vmatpush.msra.mxu0 %v2480
          %2707 = vmatpush.msra.mxu0 %v2479
          %2708 = vmatpush.msra.mxu0 %v2478
          %2709 = vmatpush.msra.mxu0 %v2477
          %2710 = vmatpush.msra.mxu0 %v2476
          %2711 = vmatmul.f32.gmra.mxu0 %v2504
          %v2712 = vpop.f32.mrf.mxu0
          %v2713 = vadd.f32 %v2693, %v2712
          %2714 = vdwg.mxu0
          %v2715 = vld [vmem:[%s9] sm:$0x3]
          %v2716 = vsub.f32 %v2715, %v2713
          %v2717 = vxor.u32 %v2716, 2147483648
          %v2718 = vmul.f32 %v2717, 1.442695
          %v2719 = vpow.pop %v2718
          %v2720 = vadd.f32 %v2719, 1.0
          %v2721 = vrcp.pop %v2720
          %v2722 = vmul.f32 %v2720, %v2721
          %v2723 = vsub.f32 1.0, %v2722
          %v2724 = vmul.f32 %v2721, %v2723
          %v2725 = vadd.f32 %v2721, %v2724
          %vm2726 = vweird.f32 %v2720
          %vm2727 = vweird.f32 %v2721
          %vm2728 = vmor %vm2726, %vm2727
          %v2729 = vsel %vm2728, %v2721, %v2725
          %v2730 = vand.u32 2147483647, %v2720
          %vm2731 = vcmp.eq.f32.partialorder %v2730, 8.507059e+37
          %v2732 = vand.u32 %v2720, 2147483648
          %v2733 = vor.u32 1.1754944e-38, %v2732
          %v2734 = vsel %vm2731, %v2733, %v2729
          %v2735 = vmul.f32 1.0, %v2734
          %v2737 = vrot.slane %v2713, 7
          %v2739 = vsub.f32 %v2715, %v2737
          %v2740 = vxor.u32 %v2739, 2147483648
          %v2741 = vmul.f32 %v2740, 1.442695
          %v2742 = vpow.pop %v2741
          %v2743 = vadd.f32 %v2742, 1.0
          %v2744 = vrcp.pop %v2743
          %v2745 = vmul.f32 %v2743, %v2744
          %v2746 = vsub.f32 1.0, %v2745
          %v2747 = vmul.f32 %v2744, %v2746
          %v2748 = vadd.f32 %v2744, %v2747
          %vm2749 = vweird.f32 %v2743
          %vm2750 = vweird.f32 %v2744
          %vm2751 = vmor %vm2749, %vm2750
          %v2752 = vsel %vm2751, %v2744, %v2748
          %v2753 = vand.u32 2147483647, %v2743
          %vm2754 = vcmp.eq.f32.partialorder %v2753, 8.507059e+37
          %v2755 = vand.u32 %v2743, 2147483648
          %v2756 = vor.u32 1.1754944e-38, %v2755
          %v2757 = vsel %vm2754, %v2756, %v2752
          %v2758 = vmul.f32 1.0, %v2757
          %v2760 = vrot.slane %v2735, 7
          %v2762 = vsub.f32 %v2758, %v2760
          %v2763 = vsub.f32 1.0, %v2758
          %v2765 = vrot.slane %v2762, 1
          %2766 = vrot.lane.b32.xlu0 %v2765, 5
          %v2767 = vpop.permute.xlu0 %2766
          %v2770 = vrot.slane %v2763, 1
          %2771 = vrot.lane.b32.xlu0 %v2770, 10
          %v2772 = vpop.permute.xlu0 %2771
          %vm2774 = vcmask 39936
          %v2775 = vsel %vm2774, %v2735, %v2767
          %vm2776 = vcmask 80896
          %v2777 = vsel %vm2776, %v2775, %v2772
          %vm2778 = vcmask 114688
          %2779 = vst.msk [vmem:[%s420] sm:$0x1] %vm2778, %v2777
        $region106: #{tpu_custom_call.1} parent=93 // pred_fallthru
          _
        %s2780 = sand.u32 %s261, 1
        %s2781 = scalar_lea.sflag [#allocation5], %s2780
        %s2782 = sand.u32 %s261, 1
        %s2783 = scalar_lea.vmem [#allocation4], %s2782
        // Predicated region
        $region107: #{tpu_custom_call.1} parent=93 // pred_check
          %p2784 = pneg %p271
        $region108: #{tpu_custom_call.1} parent=93 // pred_check_branch
          %2786 = sbr.rel (%p2784) target = $region110
        $region109: #{tpu_custom_call.1} parent=93 // pred_region
          %2788 = vsyncadd %s2781, 0
          %s2789 = scalar_lea.hbm %s10, %s28
          %s2791 = sshll.u32 %s2783, 4
          %s2792 = int_to_ptr.vmem [resolvable:$true] %s2791
          %s2793 = sshll.u32 %s2789, 4
          %s2794 = int_to_ptr.hbm [resolvable:$true] %s2793
          %2796 = dma.vmem_to_hbm [thread:$0]  %s2792, 16, %s2794, %s2781
        $region110: #{tpu_custom_call.1} parent=93 // pred_fallthru
          _
      $region94: #{tpu_custom_call.1} parent=5 // pred_fallthru
        _
      %p2797 = scmp.le.s32.totalorder 2, %s19
      // Predicated region
      $region111: #{tpu_custom_call.1} parent=5 // pred_check
        %p2798 = pneg %p2797
      $region112: #{tpu_custom_call.1} parent=5 // pred_check_branch
        %2800 = sbr.rel (%p2798) target = $region114
      $region113: #{tpu_custom_call.1} parent=5 // pred_region
        %s2801 = ssub.s32 %s19, 2
        // Predicated region
        $region115: #{tpu_custom_call.1} parent=113 // pred_check
          %p2802 = pneg %p277
        $region116: #{tpu_custom_call.1} parent=113 // pred_check_branch
          %2804 = sbr.rel (%p2802) target = $region118
        $region117: #{tpu_custom_call.1} parent=113 // pred_region
          %s2805 = sand.u32 %s262, 1
          %s2806 = scalar_lea.sflag [#allocation5], %s2805
          %s2807 = sand.u32 %s262, 1
          %s2808 = scalar_lea.vmem [#allocation4], %s2807
          %2810 = dma.done %s2806, 16
        $region118: #{tpu_custom_call.1} parent=113 // pred_fallthru
          _
      $region114: #{tpu_custom_call.1} parent=5 // pred_fallthru
        _
    $region6: #{tpu_custom_call.1} parent=1 // loop_footer
      %s23 = sadd.s32 1, %s19
    $region7: #{tpu_custom_call.1} parent=1 // loop_footer_branch
      %18 = sbr.rel target = $region3
    $region8: #{tpu_custom_call.1} parent=1 // loop_exit
      _
    %2811 = vsyncpa [#allocation5], 1
    %s2812 = scalar_lea.sflag [#allocation5], 1
    %2813 = vsyncpa %s2812, 1

</llo_original>
